<compile_context>
chip_gen: v5e
topology: v5e:2x2
jax: 0.10.0
libtpu: 0.0.40
codegen_flags: <defaults>
</compile_context>

<pallas_src>
import functools

import jax
import jax.numpy as jnp
import numpy as np
from jax.experimental import pallas as pl
from jax.experimental.pallas import tpu as pltpu


# ----------------------------------------------------------------------------
# Fused Pallas kernel (whole network, single invocation)
# ----------------------------------------------------------------------------
def _make_fused_kernel(num_layers, T, B_pad, H):
    """Build the fused kernel for static (num_layers, T, padded batch, hidden)."""

    def kernel(*refs):
        # refs = [x_flat, (w_ih, w_hh, bias) * num_layers,
        #         w_fc, b_fc, w_out, b_out, o_ref]
        x_ref = refs[0]
        lstm_refs = refs[1:1 + 3 * num_layers]
        w_fc_ref, b_fc_ref, w_out_ref, b_out_ref, o_ref = refs[1 + 3 * num_layers:]

        w_ih = [lstm_refs[3 * l][...] for l in range(num_layers)]      # bf16 (D_in, 4H)
        w_hh = [lstm_refs[3 * l + 1][...] for l in range(num_layers)]  # bf16 (H, 4H)
        bias = [lstm_refs[3 * l + 2][...] for l in range(num_layers)]  # f32  (1, 4H)

        # Hoist the (1,4H) -> (B_pad,4H) bias broadcast out of the time loop
        # (JAX does not CSE broadcast_in_dim).
        bias_full = [jnp.broadcast_to(b, (B_pad, 4 * H)) for b in bias]

        # Layer-0 input projection hoisted off the recurrence (x is known up
        # front): one MXU matmul over the whole flattened sequence.
        x_bf = x_ref[...].astype(jnp.bfloat16)
        xw0 = jnp.dot(x_bf, w_ih[0], preferred_element_type=jnp.float32) + bias[0]

        h = [jnp.zeros((B_pad, H), jnp.float32) for _ in range(num_layers)]
        c = [jnp.zeros((B_pad, H), jnp.float32) for _ in range(num_layers)]

        def cell(gates, c_prev):
            # g-gate columns of W/b were pre-scaled by 2 in the wrapper, so a
            # single whole-vreg sigmoid covers all four gates
            # (tanh(x) = 2*sigmoid(2x) - 1).  Gate order is PyTorch [i,f,g,o].
            s = jax.nn.sigmoid(gates)                 # one EUP push, (B_pad, 128)
            i_g = s[:, 0 * H:1 * H]
            f_g = s[:, 1 * H:2 * H]
            g_g = 2.0 * s[:, 2 * H:3 * H] - 1.0       # == tanh(pre-activation)
            o_g = s[:, 3 * H:4 * H]
            c_new = f_g * c_prev + i_g * g_g
            h_new = o_g * jnp.tanh(c_new)
            return h_new, c_new

        # Wavefront-skewed schedule: at wavefront w, layer l handles t = w - l.
        # Items within one wavefront are mutually independent.  Descending l
        # guarantees layer l+1 consumes layer l's output at t before layer l
        # overwrites its carry with timestep t+1.
        for w in range(T + num_layers - 1):
            for l in reversed(range(num_layers)):
                t = w - l
                if not (0 <= t < T):
                    continue
                rec = jnp.dot(h[l].astype(jnp.bfloat16), w_hh[l],
                              preferred_element_type=jnp.float32)
                if l == 0:
                    # bias already folded into xw0
                    gates = xw0[t * B_pad:(t + 1) * B_pad, :] + rec
                else:
                    below = jnp.dot(h[l - 1].astype(jnp.bfloat16), w_ih[l],
                                    preferred_element_type=jnp.float32)
                    gates = below + rec + bias_full[l]
                h[l], c[l] = cell(gates, c[l])

        # Head: fclayer -> relu -> outlayer on the top layer's final hidden
        # state.  Output is lane-padded to 128 -> unmasked stores.
        z = jnp.dot(h[num_layers - 1].astype(jnp.bfloat16), w_fc_ref[...],
                    preferred_element_type=jnp.float32) + b_fc_ref[...]
        z = jnp.maximum(z, 0.0)
        y = jnp.dot(z.astype(jnp.bfloat16), w_out_ref[...],
                    preferred_element_type=jnp.float32) + b_out_ref[...]
        o_ref[...] = y.astype(o_ref.dtype)

    return kernel


# ----------------------------------------------------------------------------
# Wrapper
# ----------------------------------------------------------------------------
def lstm_net_forward(params, x):
    """Full LSTM_net forward.  x: (batch, seq, input_size) -> (batch, num_output)."""
    B, T, D = x.shape
    B_pad = int(np.ceil(max(B, 8) / 8) * 8)   # pad batch to f32 sublane tile
    H = params["lstm"][0]["w_hh"].shape[0]
    num_layers = len(params["lstm"])
    O = params["w_out"].shape[1]
    O_pad = int(np.ceil(O / 128) * 128)       # lane-dense output (>= 128)

    # x.transpose(1, 0) in the PyTorch module -> time-major (seq, batch, input)
    x_seq = jnp.transpose(x, (1, 0, 2)).astype(jnp.float32)        # (T, B, D)
    x_seq = jnp.pad(x_seq, ((0, 0), (0, B_pad - B), (0, 0)))       # (T, B_pad, D)
    x_flat = x_seq.reshape(T * B_pad, D)                           # (T*B_pad, D)

    def scale_g(wb):
        # Pre-scale the g-gate columns by 2 so the kernel can use a single
        # whole-vreg sigmoid (tanh(x) = 2*sigmoid(2x) - 1).  Exact in binary.
        return wb.at[..., 2 * H:3 * H].multiply(2.0)

    flat_w = []
    for layer in params["lstm"]:
        flat_w.append(scale_g(layer["w_ih"]).astype(jnp.bfloat16))
        flat_w.append(scale_g(layer["w_hh"]).astype(jnp.bfloat16))
        flat_w.append(scale_g(layer["bias"]).astype(jnp.float32))
    flat_w.append(params["w_fc"].astype(jnp.bfloat16))
    flat_w.append(params["b_fc"].astype(jnp.float32))
    flat_w.append(jnp.pad(params["w_out"],
                          ((0, 0), (0, O_pad - O))).astype(jnp.bfloat16))
    flat_w.append(jnp.pad(params["b_out"],
                          ((0, 0), (0, O_pad - O))).astype(jnp.float32))

    vmem = pl.BlockSpec(memory_space=pltpu.MemorySpace.VMEM)
    out_pad = pl.pallas_call(
        _make_fused_kernel(num_layers, T, B_pad, H),
        out_shape=jax.ShapeDtypeStruct((B_pad, O_pad), jnp.float32),
        in_specs=[vmem] * (1 + len(flat_w)),
        out_specs=vmem,
    )(x_flat, *flat_w)

    return out_pad[:B, :O]


# ----------------------------------------------------------------------------
# Deterministic parameter init (PyTorch-style uniform(-1/sqrt(H), 1/sqrt(H)))
# ----------------------------------------------------------------------------
def init_params(key, num_output, input_size, hidden_size, linear_size, num_layers):
    # NOTE: weights are kept in (D_in, 4H) / (H, 4H) layout with PyTorch gate
    # order [i,f,g,o] and a pre-summed bias; loading a real PyTorch state_dict
    # ((4H, D) + separate b_ih/b_hh) requires a transpose + bias-sum step.
    params = {"lstm": []}
    H = hidden_size
    k_lstm = 1.0 / np.sqrt(H)
    for layer in range(num_layers):
        d_in = input_size if layer == 0 else hidden_size
        key, k1, k2, k3, k4 = jax.random.split(key, 5)
        w_ih = jax.random.uniform(k1, (d_in, 4 * H), jnp.float32, -k_lstm, k_lstm)
        w_hh = jax.random.uniform(k2, (H, 4 * H), jnp.float32, -k_lstm, k_lstm)
        b_ih = jax.random.uniform(k3, (4 * H,), jnp.float32, -k_lstm, k_lstm)
        b_hh = jax.random.uniform(k4, (4 * H,), jnp.float32, -k_lstm, k_lstm)
        params["lstm"].append(
            {"w_ih": w_ih, "w_hh": w_hh, "bias": (b_ih + b_hh)[None, :]})

    k_fc = 1.0 / np.sqrt(hidden_size)
    key, k1, k2 = jax.random.split(key, 3)
    params["w_fc"] = jax.random.uniform(
        k1, (hidden_size, linear_size), jnp.float32, -k_fc, k_fc)
    params["b_fc"] = jax.random.uniform(
        k2, (1, linear_size), jnp.float32, -k_fc, k_fc)

    k_out = 1.0 / np.sqrt(linear_size)
    key, k1, k2 = jax.random.split(key, 3)
    params["w_out"] = jax.random.uniform(
        k1, (linear_size, num_output), jnp.float32, -k_out, k_out)
    params["b_out"] = jax.random.uniform(
        k2, (1, num_output), jnp.float32, -k_out, k_out)
    return params


# ----------------------------------------------------------------------------
# Pure-JAX reference (f32, for correctness checking)
# ----------------------------------------------------------------------------
def lstm_net_reference(params, x):
    x_seq = jnp.transpose(x, (1, 0, 2)).astype(jnp.float32)
    for layer in params["lstm"]:
        H = layer["w_hh"].shape[0]
        B = x_seq.shape[1]

        def step(carry, x_t):
            h, c = carry
            g = x_t @ layer["w_ih"] + h @ layer["w_hh"] + layer["bias"]
            i = jax.nn.sigmoid(g[:, 0 * H:1 * H])
            f = jax.nn.sigmoid(g[:, 1 * H:2 * H])
            gg = jnp.tanh(g[:, 2 * H:3 * H])
            o = jax.nn.sigmoid(g[:, 3 * H:4 * H])
            c = f * c + i * gg
            h = o * jnp.tanh(c)
            return (h, c), h

        init = (jnp.zeros((B, H), jnp.float32), jnp.zeros((B, H), jnp.float32))
        _, x_seq = jax.lax.scan(step, init, x_seq)
    h_last = x_seq[-1]
    z = jnp.maximum(h_last @ params["w_fc"] + params["b_fc"], 0.0)
    return z @ params["w_out"] + params["b_out"]


# ----------------------------------------------------------------------------
if __name__ == "__main__":
    # module hyper-params (small, consistent with the forward)
    num_output, input_size, hidden_size = 4, 16, 32
    linear_size, num_layers, seq_length = 64, 2, 8
    batch = 2

    key = jax.random.PRNGKey(0)
    key, pkey, xkey = jax.random.split(key, 3)
    params = init_params(pkey, num_output, input_size, hidden_size,
                         linear_size, num_layers)

    # x: (batch, seq, input_size) — what LSTM_net.forward expects
    x = jax.random.normal(xkey, (batch, seq_length, input_size), jnp.float32)

    out = jax.jit(functools.partial(lstm_net_forward, params))(x)
    out = jax.block_until_ready(out)

    ref = lstm_net_reference(params, x)
    # bf16 MXU inputs (f32 accumulation) -> tolerance deliberately loosened.
    np.testing.assert_allclose(np.asarray(out), np.asarray(ref),
                               rtol=2e-2, atol=2e-2)
    assert out.shape == (batch, num_output)
    print("KERNEL_OK")
</pallas_src>

<mosaic_0001>
module attributes {stable_mosaic.version = 11 : i64} {
  func.func @kernel(%arg0: memref<64x16xf32, #tpu.memory_space<vmem>>, %arg1: memref<16x128xbf16, #tpu.memory_space<vmem>>, %arg2: memref<32x128xbf16, #tpu.memory_space<vmem>>, %arg3: memref<1x128xf32, #tpu.memory_space<vmem>>, %arg4: memref<32x128xbf16, #tpu.memory_space<vmem>>, %arg5: memref<32x128xbf16, #tpu.memory_space<vmem>>, %arg6: memref<1x128xf32, #tpu.memory_space<vmem>>, %arg7: memref<32x64xbf16, #tpu.memory_space<vmem>>, %arg8: memref<1x64xf32, #tpu.memory_space<vmem>>, %arg9: memref<64x128xbf16, #tpu.memory_space<vmem>>, %arg10: memref<1x128xf32, #tpu.memory_space<vmem>>, %arg11: memref<8x128xf32, #tpu.memory_space<vmem>>) attributes {dimension_semantics = [], scalar_prefetch = 0 : i64, scratch_operands = 0 : i64, tpu.core_type = #tpu.core_type<tc>} {
    %c0 = arith.constant 0 : index
    %c0_0 = arith.constant 0 : index
    %0 = vector.load %arg1[%c0, %c0_0] : memref<16x128xbf16, #tpu.memory_space<vmem>>, vector<16x128xbf16>
    %c0_1 = arith.constant 0 : index
    %c0_2 = arith.constant 0 : index
    %1 = vector.load %arg4[%c0_1, %c0_2] : memref<32x128xbf16, #tpu.memory_space<vmem>>, vector<32x128xbf16>
    %c0_3 = arith.constant 0 : index
    %c0_4 = arith.constant 0 : index
    %2 = vector.load %arg2[%c0_3, %c0_4] : memref<32x128xbf16, #tpu.memory_space<vmem>>, vector<32x128xbf16>
    %c0_5 = arith.constant 0 : index
    %c0_6 = arith.constant 0 : index
    %3 = vector.load %arg5[%c0_5, %c0_6] : memref<32x128xbf16, #tpu.memory_space<vmem>>, vector<32x128xbf16>
    %c0_7 = arith.constant 0 : index
    %c0_8 = arith.constant 0 : index
    %4 = vector.load %arg3[%c0_7, %c0_8] : memref<1x128xf32, #tpu.memory_space<vmem>>, vector<1x128xf32>
    %c0_9 = arith.constant 0 : index
    %c0_10 = arith.constant 0 : index
    %5 = vector.load %arg6[%c0_9, %c0_10] : memref<1x128xf32, #tpu.memory_space<vmem>>, vector<1x128xf32>
    %6 = vector.shape_cast %5 : vector<1x128xf32> to vector<1x128xf32>
    %7 = vector.broadcast %6 : vector<1x128xf32> to vector<8x128xf32>
    %c0_11 = arith.constant 0 : index
    %c0_12 = arith.constant 0 : index
    %8 = vector.load %arg0[%c0_11, %c0_12] : memref<64x16xf32, #tpu.memory_space<vmem>>, vector<64x16xf32>
    %9 = arith.truncf %8 : vector<64x16xf32> to vector<64x16xbf16>
    %cst = arith.constant dense<0.000000e+00> : vector<64x128xf32>
    %10 = tpu.matmul %9, %0, %cst {dimension_numbers = #tpu.dot_dimension_numbers<[1], [0], [0], [1], [0, 0, 1, 1], [], []>} : vector<64x16xbf16>, vector<16x128xbf16>, vector<64x128xf32> -> vector<64x128xf32>
    %11 = vector.broadcast %4 : vector<1x128xf32> to vector<64x128xf32>
    %12 = arith.addf %10, %11 : vector<64x128xf32>
    %cst_13 = arith.constant 0.000000e+00 : f32
    %13 = vector.broadcast %cst_13 : f32 to vector<8x32xf32>
    %cst_14 = arith.constant 0.000000e+00 : f32
    %14 = vector.broadcast %cst_14 : f32 to vector<8x32xf32>
    %cst_15 = arith.constant 0.000000e+00 : f32
    %15 = vector.broadcast %cst_15 : f32 to vector<8x32xf32>
    %cst_16 = arith.constant 0.000000e+00 : f32
    %16 = vector.broadcast %cst_16 : f32 to vector<8x32xf32>
    %17 = arith.truncf %13 : vector<8x32xf32> to vector<8x32xbf16>
    %cst_17 = arith.constant dense<0.000000e+00> : vector<8x128xf32>
    %18 = tpu.matmul %17, %2, %cst_17 {dimension_numbers = #tpu.dot_dimension_numbers<[1], [0], [0], [1], [0, 0, 1, 1], [], []>} : vector<8x32xbf16>, vector<32x128xbf16>, vector<8x128xf32> -> vector<8x128xf32>
    %19 = vector.extract_strided_slice %12 {offsets = [0, 0], sizes = [8, 128], strides = [1, 1]} : vector<64x128xf32> to vector<8x128xf32>
    %20 = arith.addf %19, %18 : vector<8x128xf32>
    %21 = arith.negf %20 : vector<8x128xf32>
    %22 = math.exp %21 : vector<8x128xf32>
    %cst_18 = arith.constant 1.000000e+00 : f32
    %23 = vector.broadcast %cst_18 : f32 to vector<8x128xf32>
    %24 = arith.addf %23, %22 : vector<8x128xf32>
    %25 = arith.divf %23, %24 : vector<8x128xf32>
    %26 = vector.extract_strided_slice %25 {offsets = [0, 0], sizes = [8, 32], strides = [1, 1]} : vector<8x128xf32> to vector<8x32xf32>
    %27 = vector.extract_strided_slice %25 {offsets = [0, 32], sizes = [8, 32], strides = [1, 1]} : vector<8x128xf32> to vector<8x32xf32>
    %28 = vector.extract_strided_slice %25 {offsets = [0, 64], sizes = [8, 32], strides = [1, 1]} : vector<8x128xf32> to vector<8x32xf32>
    %cst_19 = arith.constant 2.000000e+00 : f32
    %29 = vector.broadcast %cst_19 : f32 to vector<8x32xf32>
    %30 = arith.mulf %29, %28 : vector<8x32xf32>
    %cst_20 = arith.constant 1.000000e+00 : f32
    %31 = vector.broadcast %cst_20 : f32 to vector<8x32xf32>
    %32 = arith.subf %30, %31 : vector<8x32xf32>
    %33 = vector.extract_strided_slice %25 {offsets = [0, 96], sizes = [8, 32], strides = [1, 1]} : vector<8x128xf32> to vector<8x32xf32>
    %34 = arith.mulf %27, %15 : vector<8x32xf32>
    %35 = arith.mulf %26, %32 : vector<8x32xf32>
    %36 = arith.addf %34, %35 : vector<8x32xf32>
    %37 = math.tanh %36 : vector<8x32xf32>
    %38 = arith.mulf %33, %37 : vector<8x32xf32>
    %39 = arith.truncf %14 : vector<8x32xf32> to vector<8x32xbf16>
    %cst_21 = arith.constant dense<0.000000e+00> : vector<8x128xf32>
    %40 = tpu.matmul %39, %3, %cst_21 {dimension_numbers = #tpu.dot_dimension_numbers<[1], [0], [0], [1], [0, 0, 1, 1], [], []>} : vector<8x32xbf16>, vector<32x128xbf16>, vector<8x128xf32> -> vector<8x128xf32>
    %41 = arith.truncf %38 : vector<8x32xf32> to vector<8x32xbf16>
    %cst_22 = arith.constant dense<0.000000e+00> : vector<8x128xf32>
    %42 = tpu.matmul %41, %1, %cst_22 {dimension_numbers = #tpu.dot_dimension_numbers<[1], [0], [0], [1], [0, 0, 1, 1], [], []>} : vector<8x32xbf16>, vector<32x128xbf16>, vector<8x128xf32> -> vector<8x128xf32>
    %43 = arith.addf %42, %40 : vector<8x128xf32>
    %44 = arith.addf %43, %7 : vector<8x128xf32>
    %45 = arith.negf %44 : vector<8x128xf32>
    %46 = math.exp %45 : vector<8x128xf32>
    %cst_23 = arith.constant 1.000000e+00 : f32
    %47 = vector.broadcast %cst_23 : f32 to vector<8x128xf32>
    %48 = arith.addf %47, %46 : vector<8x128xf32>
    %49 = arith.divf %47, %48 : vector<8x128xf32>
    %50 = vector.extract_strided_slice %49 {offsets = [0, 0], sizes = [8, 32], strides = [1, 1]} : vector<8x128xf32> to vector<8x32xf32>
    %51 = vector.extract_strided_slice %49 {offsets = [0, 32], sizes = [8, 32], strides = [1, 1]} : vector<8x128xf32> to vector<8x32xf32>
    %52 = vector.extract_strided_slice %49 {offsets = [0, 64], sizes = [8, 32], strides = [1, 1]} : vector<8x128xf32> to vector<8x32xf32>
    %cst_24 = arith.constant 2.000000e+00 : f32
    %53 = vector.broadcast %cst_24 : f32 to vector<8x32xf32>
    %54 = arith.mulf %53, %52 : vector<8x32xf32>
    %cst_25 = arith.constant 1.000000e+00 : f32
    %55 = vector.broadcast %cst_25 : f32 to vector<8x32xf32>
    %56 = arith.subf %54, %55 : vector<8x32xf32>
    %57 = vector.extract_strided_slice %49 {offsets = [0, 96], sizes = [8, 32], strides = [1, 1]} : vector<8x128xf32> to vector<8x32xf32>
    %58 = arith.mulf %51, %16 : vector<8x32xf32>
    %59 = arith.mulf %50, %56 : vector<8x32xf32>
    %60 = arith.addf %58, %59 : vector<8x32xf32>
    %61 = math.tanh %60 : vector<8x32xf32>
    %62 = arith.mulf %57, %61 : vector<8x32xf32>
    %63 = arith.truncf %38 : vector<8x32xf32> to vector<8x32xbf16>
    %cst_26 = arith.constant dense<0.000000e+00> : vector<8x128xf32>
    %64 = tpu.matmul %63, %2, %cst_26 {dimension_numbers = #tpu.dot_dimension_numbers<[1], [0], [0], [1], [0, 0, 1, 1], [], []>} : vector<8x32xbf16>, vector<32x128xbf16>, vector<8x128xf32> -> vector<8x128xf32>
    %65 = vector.extract_strided_slice %12 {offsets = [8, 0], sizes = [8, 128], strides = [1, 1]} : vector<64x128xf32> to vector<8x128xf32>
    %66 = arith.addf %65, %64 : vector<8x128xf32>
    %67 = arith.negf %66 : vector<8x128xf32>
    %68 = math.exp %67 : vector<8x128xf32>
    %cst_27 = arith.constant 1.000000e+00 : f32
    %69 = vector.broadcast %cst_27 : f32 to vector<8x128xf32>
    %70 = arith.addf %69, %68 : vector<8x128xf32>
    %71 = arith.divf %69, %70 : vector<8x128xf32>
    %72 = vector.extract_strided_slice %71 {offsets = [0, 0], sizes = [8, 32], strides = [1, 1]} : vector<8x128xf32> to vector<8x32xf32>
    %73 = vector.extract_strided_slice %71 {offsets = [0, 32], sizes = [8, 32], strides = [1, 1]} : vector<8x128xf32> to vector<8x32xf32>
    %74 = vector.extract_strided_slice %71 {offsets = [0, 64], sizes = [8, 32], strides = [1, 1]} : vector<8x128xf32> to vector<8x32xf32>
    %cst_28 = arith.constant 2.000000e+00 : f32
    %75 = vector.broadcast %cst_28 : f32 to vector<8x32xf32>
    %76 = arith.mulf %75, %74 : vector<8x32xf32>
    %cst_29 = arith.constant 1.000000e+00 : f32
    %77 = vector.broadcast %cst_29 : f32 to vector<8x32xf32>
    %78 = arith.subf %76, %77 : vector<8x32xf32>
    %79 = vector.extract_strided_slice %71 {offsets = [0, 96], sizes = [8, 32], strides = [1, 1]} : vector<8x128xf32> to vector<8x32xf32>
    %80 = arith.mulf %73, %36 : vector<8x32xf32>
    %81 = arith.mulf %72, %78 : vector<8x32xf32>
    %82 = arith.addf %80, %81 : vector<8x32xf32>
    %83 = math.tanh %82 : vector<8x32xf32>
    %84 = arith.mulf %79, %83 : vector<8x32xf32>
    %85 = arith.truncf %62 : vector<8x32xf32> to vector<8x32xbf16>
    %cst_30 = arith.constant dense<0.000000e+00> : vector<8x128xf32>
    %86 = tpu.matmul %85, %3, %cst_30 {dimension_numbers = #tpu.dot_dimension_numbers<[1], [0], [0], [1], [0, 0, 1, 1], [], []>} : vector<8x32xbf16>, vector<32x128xbf16>, vector<8x128xf32> -> vector<8x128xf32>
    %87 = arith.truncf %84 : vector<8x32xf32> to vector<8x32xbf16>
    %cst_31 = arith.constant dense<0.000000e+00> : vector<8x128xf32>
    %88 = tpu.matmul %87, %1, %cst_31 {dimension_numbers = #tpu.dot_dimension_numbers<[1], [0], [0], [1], [0, 0, 1, 1], [], []>} : vector<8x32xbf16>, vector<32x128xbf16>, vector<8x128xf32> -> vector<8x128xf32>
    %89 = arith.addf %88, %86 : vector<8x128xf32>
    %90 = arith.addf %89, %7 : vector<8x128xf32>
    %91 = arith.negf %90 : vector<8x128xf32>
    %92 = math.exp %91 : vector<8x128xf32>
    %cst_32 = arith.constant 1.000000e+00 : f32
    %93 = vector.broadcast %cst_32 : f32 to vector<8x128xf32>
    %94 = arith.addf %93, %92 : vector<8x128xf32>
    %95 = arith.divf %93, %94 : vector<8x128xf32>
    %96 = vector.extract_strided_slice %95 {offsets = [0, 0], sizes = [8, 32], strides = [1, 1]} : vector<8x128xf32> to vector<8x32xf32>
    %97 = vector.extract_strided_slice %95 {offsets = [0, 32], sizes = [8, 32], strides = [1, 1]} : vector<8x128xf32> to vector<8x32xf32>
    %98 = vector.extract_strided_slice %95 {offsets = [0, 64], sizes = [8, 32], strides = [1, 1]} : vector<8x128xf32> to vector<8x32xf32>
    %cst_33 = arith.constant 2.000000e+00 : f32
    %99 = vector.broadcast %cst_33 : f32 to vector<8x32xf32>
    %100 = arith.mulf %99, %98 : vector<8x32xf32>
    %cst_34 = arith.constant 1.000000e+00 : f32
    %101 = vector.broadcast %cst_34 : f32 to vector<8x32xf32>
    %102 = arith.subf %100, %101 : vector<8x32xf32>
    %103 = vector.extract_strided_slice %95 {offsets = [0, 96], sizes = [8, 32], strides = [1, 1]} : vector<8x128xf32> to vector<8x32xf32>
    %104 = arith.mulf %97, %60 : vector<8x32xf32>
    %105 = arith.mulf %96, %102 : vector<8x32xf32>
    %106 = arith.addf %104, %105 : vector<8x32xf32>
    %107 = math.tanh %106 : vector<8x32xf32>
    %108 = arith.mulf %103, %107 : vector<8x32xf32>
    %109 = arith.truncf %84 : vector<8x32xf32> to vector<8x32xbf16>
    %cst_35 = arith.constant dense<0.000000e+00> : vector<8x128xf32>
    %110 = tpu.matmul %109, %2, %cst_35 {dimension_numbers = #tpu.dot_dimension_numbers<[1], [0], [0], [1], [0, 0, 1, 1], [], []>} : vector<8x32xbf16>, vector<32x128xbf16>, vector<8x128xf32> -> vector<8x128xf32>
    %111 = vector.extract_strided_slice %12 {offsets = [16, 0], sizes = [8, 128], strides = [1, 1]} : vector<64x128xf32> to vector<8x128xf32>
    %112 = arith.addf %111, %110 : vector<8x128xf32>
    %113 = arith.negf %112 : vector<8x128xf32>
    %114 = math.exp %113 : vector<8x128xf32>
    %cst_36 = arith.constant 1.000000e+00 : f32
    %115 = vector.broadcast %cst_36 : f32 to vector<8x128xf32>
    %116 = arith.addf %115, %114 : vector<8x128xf32>
    %117 = arith.divf %115, %116 : vector<8x128xf32>
    %118 = vector.extract_strided_slice %117 {offsets = [0, 0], sizes = [8, 32], strides = [1, 1]} : vector<8x128xf32> to vector<8x32xf32>
    %119 = vector.extract_strided_slice %117 {offsets = [0, 32], sizes = [8, 32], strides = [1, 1]} : vector<8x128xf32> to vector<8x32xf32>
    %120 = vector.extract_strided_slice %117 {offsets = [0, 64], sizes = [8, 32], strides = [1, 1]} : vector<8x128xf32> to vector<8x32xf32>
    %cst_37 = arith.constant 2.000000e+00 : f32
    %121 = vector.broadcast %cst_37 : f32 to vector<8x32xf32>
    %122 = arith.mulf %121, %120 : vector<8x32xf32>
    %cst_38 = arith.constant 1.000000e+00 : f32
    %123 = vector.broadcast %cst_38 : f32 to vector<8x32xf32>
    %124 = arith.subf %122, %123 : vector<8x32xf32>
    %125 = vector.extract_strided_slice %117 {offsets = [0, 96], sizes = [8, 32], strides = [1, 1]} : vector<8x128xf32> to vector<8x32xf32>
    %126 = arith.mulf %119, %82 : vector<8x32xf32>
    %127 = arith.mulf %118, %124 : vector<8x32xf32>
    %128 = arith.addf %126, %127 : vector<8x32xf32>
    %129 = math.tanh %128 : vector<8x32xf32>
    %130 = arith.mulf %125, %129 : vector<8x32xf32>
    %131 = arith.truncf %108 : vector<8x32xf32> to vector<8x32xbf16>
    %cst_39 = arith.constant dense<0.000000e+00> : vector<8x128xf32>
    %132 = tpu.matmul %131, %3, %cst_39 {dimension_numbers = #tpu.dot_dimension_numbers<[1], [0], [0], [1], [0, 0, 1, 1], [], []>} : vector<8x32xbf16>, vector<32x128xbf16>, vector<8x128xf32> -> vector<8x128xf32>
    %133 = arith.truncf %130 : vector<8x32xf32> to vector<8x32xbf16>
    %cst_40 = arith.constant dense<0.000000e+00> : vector<8x128xf32>
    %134 = tpu.matmul %133, %1, %cst_40 {dimension_numbers = #tpu.dot_dimension_numbers<[1], [0], [0], [1], [0, 0, 1, 1], [], []>} : vector<8x32xbf16>, vector<32x128xbf16>, vector<8x128xf32> -> vector<8x128xf32>
    %135 = arith.addf %134, %132 : vector<8x128xf32>
    %136 = arith.addf %135, %7 : vector<8x128xf32>
    %137 = arith.negf %136 : vector<8x128xf32>
    %138 = math.exp %137 : vector<8x128xf32>
    %cst_41 = arith.constant 1.000000e+00 : f32
    %139 = vector.broadcast %cst_41 : f32 to vector<8x128xf32>
    %140 = arith.addf %139, %138 : vector<8x128xf32>
    %141 = arith.divf %139, %140 : vector<8x128xf32>
    %142 = vector.extract_strided_slice %141 {offsets = [0, 0], sizes = [8, 32], strides = [1, 1]} : vector<8x128xf32> to vector<8x32xf32>
    %143 = vector.extract_strided_slice %141 {offsets = [0, 32], sizes = [8, 32], strides = [1, 1]} : vector<8x128xf32> to vector<8x32xf32>
    %144 = vector.extract_strided_slice %141 {offsets = [0, 64], sizes = [8, 32], strides = [1, 1]} : vector<8x128xf32> to vector<8x32xf32>
    %cst_42 = arith.constant 2.000000e+00 : f32
    %145 = vector.broadcast %cst_42 : f32 to vector<8x32xf32>
    %146 = arith.mulf %145, %144 : vector<8x32xf32>
    %cst_43 = arith.constant 1.000000e+00 : f32
    %147 = vector.broadcast %cst_43 : f32 to vector<8x32xf32>
    %148 = arith.subf %146, %147 : vector<8x32xf32>
    %149 = vector.extract_strided_slice %141 {offsets = [0, 96], sizes = [8, 32], strides = [1, 1]} : vector<8x128xf32> to vector<8x32xf32>
    %150 = arith.mulf %143, %106 : vector<8x32xf32>
    %151 = arith.mulf %142, %148 : vector<8x32xf32>
    %152 = arith.addf %150, %151 : vector<8x32xf32>
    %153 = math.tanh %152 : vector<8x32xf32>
    %154 = arith.mulf %149, %153 : vector<8x32xf32>
    %155 = arith.truncf %130 : vector<8x32xf32> to vector<8x32xbf16>
    %cst_44 = arith.constant dense<0.000000e+00> : vector<8x128xf32>
    %156 = tpu.matmul %155, %2, %cst_44 {dimension_numbers = #tpu.dot_dimension_numbers<[1], [0], [0], [1], [0, 0, 1, 1], [], []>} : vector<8x32xbf16>, vector<32x128xbf16>, vector<8x128xf32> -> vector<8x128xf32>
    %157 = vector.extract_strided_slice %12 {offsets = [24, 0], sizes = [8, 128], strides = [1, 1]} : vector<64x128xf32> to vector<8x128xf32>
    %158 = arith.addf %157, %156 : vector<8x128xf32>
    %159 = arith.negf %158 : vector<8x128xf32>
    %160 = math.exp %159 : vector<8x128xf32>
    %cst_45 = arith.constant 1.000000e+00 : f32
    %161 = vector.broadcast %cst_45 : f32 to vector<8x128xf32>
    %162 = arith.addf %161, %160 : vector<8x128xf32>
    %163 = arith.divf %161, %162 : vector<8x128xf32>
    %164 = vector.extract_strided_slice %163 {offsets = [0, 0], sizes = [8, 32], strides = [1, 1]} : vector<8x128xf32> to vector<8x32xf32>
    %165 = vector.extract_strided_slice %163 {offsets = [0, 32], sizes = [8, 32], strides = [1, 1]} : vector<8x128xf32> to vector<8x32xf32>
    %166 = vector.extract_strided_slice %163 {offsets = [0, 64], sizes = [8, 32], strides = [1, 1]} : vector<8x128xf32> to vector<8x32xf32>
    %cst_46 = arith.constant 2.000000e+00 : f32
    %167 = vector.broadcast %cst_46 : f32 to vector<8x32xf32>
    %168 = arith.mulf %167, %166 : vector<8x32xf32>
    %cst_47 = arith.constant 1.000000e+00 : f32
    %169 = vector.broadcast %cst_47 : f32 to vector<8x32xf32>
    %170 = arith.subf %168, %169 : vector<8x32xf32>
    %171 = vector.extract_strided_slice %163 {offsets = [0, 96], sizes = [8, 32], strides = [1, 1]} : vector<8x128xf32> to vector<8x32xf32>
    %172 = arith.mulf %165, %128 : vector<8x32xf32>
    %173 = arith.mulf %164, %170 : vector<8x32xf32>
    %174 = arith.addf %172, %173 : vector<8x32xf32>
    %175 = math.tanh %174 : vector<8x32xf32>
    %176 = arith.mulf %171, %175 : vector<8x32xf32>
    %177 = arith.truncf %154 : vector<8x32xf32> to vector<8x32xbf16>
    %cst_48 = arith.constant dense<0.000000e+00> : vector<8x128xf32>
    %178 = tpu.matmul %177, %3, %cst_48 {dimension_numbers = #tpu.dot_dimension_numbers<[1], [0], [0], [1], [0, 0, 1, 1], [], []>} : vector<8x32xbf16>, vector<32x128xbf16>, vector<8x128xf32> -> vector<8x128xf32>
    %179 = arith.truncf %176 : vector<8x32xf32> to vector<8x32xbf16>
    %cst_49 = arith.constant dense<0.000000e+00> : vector<8x128xf32>
    %180 = tpu.matmul %179, %1, %cst_49 {dimension_numbers = #tpu.dot_dimension_numbers<[1], [0], [0], [1], [0, 0, 1, 1], [], []>} : vector<8x32xbf16>, vector<32x128xbf16>, vector<8x128xf32> -> vector<8x128xf32>
    %181 = arith.addf %180, %178 : vector<8x128xf32>
    %182 = arith.addf %181, %7 : vector<8x128xf32>
    %183 = arith.negf %182 : vector<8x128xf32>
    %184 = math.exp %183 : vector<8x128xf32>
    %cst_50 = arith.constant 1.000000e+00 : f32
    %185 = vector.broadcast %cst_50 : f32 to vector<8x128xf32>
    %186 = arith.addf %185, %184 : vector<8x128xf32>
    %187 = arith.divf %185, %186 : vector<8x128xf32>
    %188 = vector.extract_strided_slice %187 {offsets = [0, 0], sizes = [8, 32], strides = [1, 1]} : vector<8x128xf32> to vector<8x32xf32>
    %189 = vector.extract_strided_slice %187 {offsets = [0, 32], sizes = [8, 32], strides = [1, 1]} : vector<8x128xf32> to vector<8x32xf32>
    %190 = vector.extract_strided_slice %187 {offsets = [0, 64], sizes = [8, 32], strides = [1, 1]} : vector<8x128xf32> to vector<8x32xf32>
    %cst_51 = arith.constant 2.000000e+00 : f32
    %191 = vector.broadcast %cst_51 : f32 to vector<8x32xf32>
    %192 = arith.mulf %191, %190 : vector<8x32xf32>
    %cst_52 = arith.constant 1.000000e+00 : f32
    %193 = vector.broadcast %cst_52 : f32 to vector<8x32xf32>
    %194 = arith.subf %192, %193 : vector<8x32xf32>
    %195 = vector.extract_strided_slice %187 {offsets = [0, 96], sizes = [8, 32], strides = [1, 1]} : vector<8x128xf32> to vector<8x32xf32>
    %196 = arith.mulf %189, %152 : vector<8x32xf32>
    %197 = arith.mulf %188, %194 : vector<8x32xf32>
    %198 = arith.addf %196, %197 : vector<8x32xf32>
    %199 = math.tanh %198 : vector<8x32xf32>
    %200 = arith.mulf %195, %199 : vector<8x32xf32>
    %201 = arith.truncf %176 : vector<8x32xf32> to vector<8x32xbf16>
    %cst_53 = arith.constant dense<0.000000e+00> : vector<8x128xf32>
    %202 = tpu.matmul %201, %2, %cst_53 {dimension_numbers = #tpu.dot_dimension_numbers<[1], [0], [0], [1], [0, 0, 1, 1], [], []>} : vector<8x32xbf16>, vector<32x128xbf16>, vector<8x128xf32> -> vector<8x128xf32>
    %203 = vector.extract_strided_slice %12 {offsets = [32, 0], sizes = [8, 128], strides = [1, 1]} : vector<64x128xf32> to vector<8x128xf32>
    %204 = arith.addf %203, %202 : vector<8x128xf32>
    %205 = arith.negf %204 : vector<8x128xf32>
    %206 = math.exp %205 : vector<8x128xf32>
    %cst_54 = arith.constant 1.000000e+00 : f32
    %207 = vector.broadcast %cst_54 : f32 to vector<8x128xf32>
    %208 = arith.addf %207, %206 : vector<8x128xf32>
    %209 = arith.divf %207, %208 : vector<8x128xf32>
    %210 = vector.extract_strided_slice %209 {offsets = [0, 0], sizes = [8, 32], strides = [1, 1]} : vector<8x128xf32> to vector<8x32xf32>
    %211 = vector.extract_strided_slice %209 {offsets = [0, 32], sizes = [8, 32], strides = [1, 1]} : vector<8x128xf32> to vector<8x32xf32>
    %212 = vector.extract_strided_slice %209 {offsets = [0, 64], sizes = [8, 32], strides = [1, 1]} : vector<8x128xf32> to vector<8x32xf32>
    %cst_55 = arith.constant 2.000000e+00 : f32
    %213 = vector.broadcast %cst_55 : f32 to vector<8x32xf32>
    %214 = arith.mulf %213, %212 : vector<8x32xf32>
    %cst_56 = arith.constant 1.000000e+00 : f32
    %215 = vector.broadcast %cst_56 : f32 to vector<8x32xf32>
    %216 = arith.subf %214, %215 : vector<8x32xf32>
    %217 = vector.extract_strided_slice %209 {offsets = [0, 96], sizes = [8, 32], strides = [1, 1]} : vector<8x128xf32> to vector<8x32xf32>
    %218 = arith.mulf %211, %174 : vector<8x32xf32>
    %219 = arith.mulf %210, %216 : vector<8x32xf32>
    %220 = arith.addf %218, %219 : vector<8x32xf32>
    %221 = math.tanh %220 : vector<8x32xf32>
    %222 = arith.mulf %217, %221 : vector<8x32xf32>
    %223 = arith.truncf %200 : vector<8x32xf32> to vector<8x32xbf16>
    %cst_57 = arith.constant dense<0.000000e+00> : vector<8x128xf32>
    %224 = tpu.matmul %223, %3, %cst_57 {dimension_numbers = #tpu.dot_dimension_numbers<[1], [0], [0], [1], [0, 0, 1, 1], [], []>} : vector<8x32xbf16>, vector<32x128xbf16>, vector<8x128xf32> -> vector<8x128xf32>
    %225 = arith.truncf %222 : vector<8x32xf32> to vector<8x32xbf16>
    %cst_58 = arith.constant dense<0.000000e+00> : vector<8x128xf32>
    %226 = tpu.matmul %225, %1, %cst_58 {dimension_numbers = #tpu.dot_dimension_numbers<[1], [0], [0], [1], [0, 0, 1, 1], [], []>} : vector<8x32xbf16>, vector<32x128xbf16>, vector<8x128xf32> -> vector<8x128xf32>
    %227 = arith.addf %226, %224 : vector<8x128xf32>
    %228 = arith.addf %227, %7 : vector<8x128xf32>
    %229 = arith.negf %228 : vector<8x128xf32>
    %230 = math.exp %229 : vector<8x128xf32>
    %cst_59 = arith.constant 1.000000e+00 : f32
    %231 = vector.broadcast %cst_59 : f32 to vector<8x128xf32>
    %232 = arith.addf %231, %230 : vector<8x128xf32>
    %233 = arith.divf %231, %232 : vector<8x128xf32>
    %234 = vector.extract_strided_slice %233 {offsets = [0, 0], sizes = [8, 32], strides = [1, 1]} : vector<8x128xf32> to vector<8x32xf32>
    %235 = vector.extract_strided_slice %233 {offsets = [0, 32], sizes = [8, 32], strides = [1, 1]} : vector<8x128xf32> to vector<8x32xf32>
    %236 = vector.extract_strided_slice %233 {offsets = [0, 64], sizes = [8, 32], strides = [1, 1]} : vector<8x128xf32> to vector<8x32xf32>
    %cst_60 = arith.constant 2.000000e+00 : f32
    %237 = vector.broadcast %cst_60 : f32 to vector<8x32xf32>
    %238 = arith.mulf %237, %236 : vector<8x32xf32>
    %cst_61 = arith.constant 1.000000e+00 : f32
    %239 = vector.broadcast %cst_61 : f32 to vector<8x32xf32>
    %240 = arith.subf %238, %239 : vector<8x32xf32>
    %241 = vector.extract_strided_slice %233 {offsets = [0, 96], sizes = [8, 32], strides = [1, 1]} : vector<8x128xf32> to vector<8x32xf32>
    %242 = arith.mulf %235, %198 : vector<8x32xf32>
    %243 = arith.mulf %234, %240 : vector<8x32xf32>
    %244 = arith.addf %242, %243 : vector<8x32xf32>
    %245 = math.tanh %244 : vector<8x32xf32>
    %246 = arith.mulf %241, %245 : vector<8x32xf32>
    %247 = arith.truncf %222 : vector<8x32xf32> to vector<8x32xbf16>
    %cst_62 = arith.constant dense<0.000000e+00> : vector<8x128xf32>
    %248 = tpu.matmul %247, %2, %cst_62 {dimension_numbers = #tpu.dot_dimension_numbers<[1], [0], [0], [1], [0, 0, 1, 1], [], []>} : vector<8x32xbf16>, vector<32x128xbf16>, vector<8x128xf32> -> vector<8x128xf32>
    %249 = vector.extract_strided_slice %12 {offsets = [40, 0], sizes = [8, 128], strides = [1, 1]} : vector<64x128xf32> to vector<8x128xf32>
    %250 = arith.addf %249, %248 : vector<8x128xf32>
    %251 = arith.negf %250 : vector<8x128xf32>
    %252 = math.exp %251 : vector<8x128xf32>
    %cst_63 = arith.constant 1.000000e+00 : f32
    %253 = vector.broadcast %cst_63 : f32 to vector<8x128xf32>
    %254 = arith.addf %253, %252 : vector<8x128xf32>
    %255 = arith.divf %253, %254 : vector<8x128xf32>
    %256 = vector.extract_strided_slice %255 {offsets = [0, 0], sizes = [8, 32], strides = [1, 1]} : vector<8x128xf32> to vector<8x32xf32>
    %257 = vector.extract_strided_slice %255 {offsets = [0, 32], sizes = [8, 32], strides = [1, 1]} : vector<8x128xf32> to vector<8x32xf32>
    %258 = vector.extract_strided_slice %255 {offsets = [0, 64], sizes = [8, 32], strides = [1, 1]} : vector<8x128xf32> to vector<8x32xf32>
    %cst_64 = arith.constant 2.000000e+00 : f32
    %259 = vector.broadcast %cst_64 : f32 to vector<8x32xf32>
    %260 = arith.mulf %259, %258 : vector<8x32xf32>
    %cst_65 = arith.constant 1.000000e+00 : f32
    %261 = vector.broadcast %cst_65 : f32 to vector<8x32xf32>
    %262 = arith.subf %260, %261 : vector<8x32xf32>
    %263 = vector.extract_strided_slice %255 {offsets = [0, 96], sizes = [8, 32], strides = [1, 1]} : vector<8x128xf32> to vector<8x32xf32>
    %264 = arith.mulf %257, %220 : vector<8x32xf32>
    %265 = arith.mulf %256, %262 : vector<8x32xf32>
    %266 = arith.addf %264, %265 : vector<8x32xf32>
    %267 = math.tanh %266 : vector<8x32xf32>
    %268 = arith.mulf %263, %267 : vector<8x32xf32>
    %269 = arith.truncf %246 : vector<8x32xf32> to vector<8x32xbf16>
    %cst_66 = arith.constant dense<0.000000e+00> : vector<8x128xf32>
    %270 = tpu.matmul %269, %3, %cst_66 {dimension_numbers = #tpu.dot_dimension_numbers<[1], [0], [0], [1], [0, 0, 1, 1], [], []>} : vector<8x32xbf16>, vector<32x128xbf16>, vector<8x128xf32> -> vector<8x128xf32>
    %271 = arith.truncf %268 : vector<8x32xf32> to vector<8x32xbf16>
    %cst_67 = arith.constant dense<0.000000e+00> : vector<8x128xf32>
    %272 = tpu.matmul %271, %1, %cst_67 {dimension_numbers = #tpu.dot_dimension_numbers<[1], [0], [0], [1], [0, 0, 1, 1], [], []>} : vector<8x32xbf16>, vector<32x128xbf16>, vector<8x128xf32> -> vector<8x128xf32>
    %273 = arith.addf %272, %270 : vector<8x128xf32>
    %274 = arith.addf %273, %7 : vector<8x128xf32>
    %275 = arith.negf %274 : vector<8x128xf32>
    %276 = math.exp %275 : vector<8x128xf32>
    %cst_68 = arith.constant 1.000000e+00 : f32
    %277 = vector.broadcast %cst_68 : f32 to vector<8x128xf32>
    %278 = arith.addf %277, %276 : vector<8x128xf32>
    %279 = arith.divf %277, %278 : vector<8x128xf32>
    %280 = vector.extract_strided_slice %279 {offsets = [0, 0], sizes = [8, 32], strides = [1, 1]} : vector<8x128xf32> to vector<8x32xf32>
    %281 = vector.extract_strided_slice %279 {offsets = [0, 32], sizes = [8, 32], strides = [1, 1]} : vector<8x128xf32> to vector<8x32xf32>
    %282 = vector.extract_strided_slice %279 {offsets = [0, 64], sizes = [8, 32], strides = [1, 1]} : vector<8x128xf32> to vector<8x32xf32>
    %cst_69 = arith.constant 2.000000e+00 : f32
    %283 = vector.broadcast %cst_69 : f32 to vector<8x32xf32>
    %284 = arith.mulf %283, %282 : vector<8x32xf32>
    %cst_70 = arith.constant 1.000000e+00 : f32
    %285 = vector.broadcast %cst_70 : f32 to vector<8x32xf32>
    %286 = arith.subf %284, %285 : vector<8x32xf32>
    %287 = vector.extract_strided_slice %279 {offsets = [0, 96], sizes = [8, 32], strides = [1, 1]} : vector<8x128xf32> to vector<8x32xf32>
    %288 = arith.mulf %281, %244 : vector<8x32xf32>
    %289 = arith.mulf %280, %286 : vector<8x32xf32>
    %290 = arith.addf %288, %289 : vector<8x32xf32>
    %291 = math.tanh %290 : vector<8x32xf32>
    %292 = arith.mulf %287, %291 : vector<8x32xf32>
    %293 = arith.truncf %268 : vector<8x32xf32> to vector<8x32xbf16>
    %cst_71 = arith.constant dense<0.000000e+00> : vector<8x128xf32>
    %294 = tpu.matmul %293, %2, %cst_71 {dimension_numbers = #tpu.dot_dimension_numbers<[1], [0], [0], [1], [0, 0, 1, 1], [], []>} : vector<8x32xbf16>, vector<32x128xbf16>, vector<8x128xf32> -> vector<8x128xf32>
    %295 = vector.extract_strided_slice %12 {offsets = [48, 0], sizes = [8, 128], strides = [1, 1]} : vector<64x128xf32> to vector<8x128xf32>
    %296 = arith.addf %295, %294 : vector<8x128xf32>
    %297 = arith.negf %296 : vector<8x128xf32>
    %298 = math.exp %297 : vector<8x128xf32>
    %cst_72 = arith.constant 1.000000e+00 : f32
    %299 = vector.broadcast %cst_72 : f32 to vector<8x128xf32>
    %300 = arith.addf %299, %298 : vector<8x128xf32>
    %301 = arith.divf %299, %300 : vector<8x128xf32>
    %302 = vector.extract_strided_slice %301 {offsets = [0, 0], sizes = [8, 32], strides = [1, 1]} : vector<8x128xf32> to vector<8x32xf32>
    %303 = vector.extract_strided_slice %301 {offsets = [0, 32], sizes = [8, 32], strides = [1, 1]} : vector<8x128xf32> to vector<8x32xf32>
    %304 = vector.extract_strided_slice %301 {offsets = [0, 64], sizes = [8, 32], strides = [1, 1]} : vector<8x128xf32> to vector<8x32xf32>
    %cst_73 = arith.constant 2.000000e+00 : f32
    %305 = vector.broadcast %cst_73 : f32 to vector<8x32xf32>
    %306 = arith.mulf %305, %304 : vector<8x32xf32>
    %cst_74 = arith.constant 1.000000e+00 : f32
    %307 = vector.broadcast %cst_74 : f32 to vector<8x32xf32>
    %308 = arith.subf %306, %307 : vector<8x32xf32>
    %309 = vector.extract_strided_slice %301 {offsets = [0, 96], sizes = [8, 32], strides = [1, 1]} : vector<8x128xf32> to vector<8x32xf32>
    %310 = arith.mulf %303, %266 : vector<8x32xf32>
    %311 = arith.mulf %302, %308 : vector<8x32xf32>
    %312 = arith.addf %310, %311 : vector<8x32xf32>
    %313 = math.tanh %312 : vector<8x32xf32>
    %314 = arith.mulf %309, %313 : vector<8x32xf32>
    %315 = arith.truncf %292 : vector<8x32xf32> to vector<8x32xbf16>
    %cst_75 = arith.constant dense<0.000000e+00> : vector<8x128xf32>
    %316 = tpu.matmul %315, %3, %cst_75 {dimension_numbers = #tpu.dot_dimension_numbers<[1], [0], [0], [1], [0, 0, 1, 1], [], []>} : vector<8x32xbf16>, vector<32x128xbf16>, vector<8x128xf32> -> vector<8x128xf32>
    %317 = arith.truncf %314 : vector<8x32xf32> to vector<8x32xbf16>
    %cst_76 = arith.constant dense<0.000000e+00> : vector<8x128xf32>
    %318 = tpu.matmul %317, %1, %cst_76 {dimension_numbers = #tpu.dot_dimension_numbers<[1], [0], [0], [1], [0, 0, 1, 1], [], []>} : vector<8x32xbf16>, vector<32x128xbf16>, vector<8x128xf32> -> vector<8x128xf32>
    %319 = arith.addf %318, %316 : vector<8x128xf32>
    %320 = arith.addf %319, %7 : vector<8x128xf32>
    %321 = arith.negf %320 : vector<8x128xf32>
    %322 = math.exp %321 : vector<8x128xf32>
    %cst_77 = arith.constant 1.000000e+00 : f32
    %323 = vector.broadcast %cst_77 : f32 to vector<8x128xf32>
    %324 = arith.addf %323, %322 : vector<8x128xf32>
    %325 = arith.divf %323, %324 : vector<8x128xf32>
    %326 = vector.extract_strided_slice %325 {offsets = [0, 0], sizes = [8, 32], strides = [1, 1]} : vector<8x128xf32> to vector<8x32xf32>
    %327 = vector.extract_strided_slice %325 {offsets = [0, 32], sizes = [8, 32], strides = [1, 1]} : vector<8x128xf32> to vector<8x32xf32>
    %328 = vector.extract_strided_slice %325 {offsets = [0, 64], sizes = [8, 32], strides = [1, 1]} : vector<8x128xf32> to vector<8x32xf32>
    %cst_78 = arith.constant 2.000000e+00 : f32
    %329 = vector.broadcast %cst_78 : f32 to vector<8x32xf32>
    %330 = arith.mulf %329, %328 : vector<8x32xf32>
    %cst_79 = arith.constant 1.000000e+00 : f32
    %331 = vector.broadcast %cst_79 : f32 to vector<8x32xf32>
    %332 = arith.subf %330, %331 : vector<8x32xf32>
    %333 = vector.extract_strided_slice %325 {offsets = [0, 96], sizes = [8, 32], strides = [1, 1]} : vector<8x128xf32> to vector<8x32xf32>
    %334 = arith.mulf %327, %290 : vector<8x32xf32>
    %335 = arith.mulf %326, %332 : vector<8x32xf32>
    %336 = arith.addf %334, %335 : vector<8x32xf32>
    %337 = math.tanh %336 : vector<8x32xf32>
    %338 = arith.mulf %333, %337 : vector<8x32xf32>
    %339 = arith.truncf %314 : vector<8x32xf32> to vector<8x32xbf16>
    %cst_80 = arith.constant dense<0.000000e+00> : vector<8x128xf32>
    %340 = tpu.matmul %339, %2, %cst_80 {dimension_numbers = #tpu.dot_dimension_numbers<[1], [0], [0], [1], [0, 0, 1, 1], [], []>} : vector<8x32xbf16>, vector<32x128xbf16>, vector<8x128xf32> -> vector<8x128xf32>
    %341 = vector.extract_strided_slice %12 {offsets = [56, 0], sizes = [8, 128], strides = [1, 1]} : vector<64x128xf32> to vector<8x128xf32>
    %342 = arith.addf %341, %340 : vector<8x128xf32>
    %343 = arith.negf %342 : vector<8x128xf32>
    %344 = math.exp %343 : vector<8x128xf32>
    %cst_81 = arith.constant 1.000000e+00 : f32
    %345 = vector.broadcast %cst_81 : f32 to vector<8x128xf32>
    %346 = arith.addf %345, %344 : vector<8x128xf32>
    %347 = arith.divf %345, %346 : vector<8x128xf32>
    %348 = vector.extract_strided_slice %347 {offsets = [0, 0], sizes = [8, 32], strides = [1, 1]} : vector<8x128xf32> to vector<8x32xf32>
    %349 = vector.extract_strided_slice %347 {offsets = [0, 32], sizes = [8, 32], strides = [1, 1]} : vector<8x128xf32> to vector<8x32xf32>
    %350 = vector.extract_strided_slice %347 {offsets = [0, 64], sizes = [8, 32], strides = [1, 1]} : vector<8x128xf32> to vector<8x32xf32>
    %cst_82 = arith.constant 2.000000e+00 : f32
    %351 = vector.broadcast %cst_82 : f32 to vector<8x32xf32>
    %352 = arith.mulf %351, %350 : vector<8x32xf32>
    %cst_83 = arith.constant 1.000000e+00 : f32
    %353 = vector.broadcast %cst_83 : f32 to vector<8x32xf32>
    %354 = arith.subf %352, %353 : vector<8x32xf32>
    %355 = vector.extract_strided_slice %347 {offsets = [0, 96], sizes = [8, 32], strides = [1, 1]} : vector<8x128xf32> to vector<8x32xf32>
    %356 = arith.mulf %349, %312 : vector<8x32xf32>
    %357 = arith.mulf %348, %354 : vector<8x32xf32>
    %358 = arith.addf %356, %357 : vector<8x32xf32>
    %359 = math.tanh %358 : vector<8x32xf32>
    %360 = arith.mulf %355, %359 : vector<8x32xf32>
    %361 = arith.truncf %338 : vector<8x32xf32> to vector<8x32xbf16>
    %cst_84 = arith.constant dense<0.000000e+00> : vector<8x128xf32>
    %362 = tpu.matmul %361, %3, %cst_84 {dimension_numbers = #tpu.dot_dimension_numbers<[1], [0], [0], [1], [0, 0, 1, 1], [], []>} : vector<8x32xbf16>, vector<32x128xbf16>, vector<8x128xf32> -> vector<8x128xf32>
    %363 = arith.truncf %360 : vector<8x32xf32> to vector<8x32xbf16>
    %cst_85 = arith.constant dense<0.000000e+00> : vector<8x128xf32>
    %364 = tpu.matmul %363, %1, %cst_85 {dimension_numbers = #tpu.dot_dimension_numbers<[1], [0], [0], [1], [0, 0, 1, 1], [], []>} : vector<8x32xbf16>, vector<32x128xbf16>, vector<8x128xf32> -> vector<8x128xf32>
    %365 = arith.addf %364, %362 : vector<8x128xf32>
    %366 = arith.addf %365, %7 : vector<8x128xf32>
    %367 = arith.negf %366 : vector<8x128xf32>
    %368 = math.exp %367 : vector<8x128xf32>
    %cst_86 = arith.constant 1.000000e+00 : f32
    %369 = vector.broadcast %cst_86 : f32 to vector<8x128xf32>
    %370 = arith.addf %369, %368 : vector<8x128xf32>
    %371 = arith.divf %369, %370 : vector<8x128xf32>
    %372 = vector.extract_strided_slice %371 {offsets = [0, 0], sizes = [8, 32], strides = [1, 1]} : vector<8x128xf32> to vector<8x32xf32>
    %373 = vector.extract_strided_slice %371 {offsets = [0, 32], sizes = [8, 32], strides = [1, 1]} : vector<8x128xf32> to vector<8x32xf32>
    %374 = vector.extract_strided_slice %371 {offsets = [0, 64], sizes = [8, 32], strides = [1, 1]} : vector<8x128xf32> to vector<8x32xf32>
    %cst_87 = arith.constant 2.000000e+00 : f32
    %375 = vector.broadcast %cst_87 : f32 to vector<8x32xf32>
    %376 = arith.mulf %375, %374 : vector<8x32xf32>
    %cst_88 = arith.constant 1.000000e+00 : f32
    %377 = vector.broadcast %cst_88 : f32 to vector<8x32xf32>
    %378 = arith.subf %376, %377 : vector<8x32xf32>
    %379 = vector.extract_strided_slice %371 {offsets = [0, 96], sizes = [8, 32], strides = [1, 1]} : vector<8x128xf32> to vector<8x32xf32>
    %380 = arith.mulf %373, %336 : vector<8x32xf32>
    %381 = arith.mulf %372, %378 : vector<8x32xf32>
    %382 = arith.addf %380, %381 : vector<8x32xf32>
    %383 = math.tanh %382 : vector<8x32xf32>
    %384 = arith.mulf %379, %383 : vector<8x32xf32>
    %385 = arith.truncf %384 : vector<8x32xf32> to vector<8x32xbf16>
    %c0_89 = arith.constant 0 : index
    %c0_90 = arith.constant 0 : index
    %386 = vector.load %arg7[%c0_89, %c0_90] : memref<32x64xbf16, #tpu.memory_space<vmem>>, vector<32x64xbf16>
    %cst_91 = arith.constant dense<0.000000e+00> : vector<8x64xf32>
    %387 = tpu.matmul %385, %386, %cst_91 {dimension_numbers = #tpu.dot_dimension_numbers<[1], [0], [0], [1], [0, 0, 1, 1], [], []>} : vector<8x32xbf16>, vector<32x64xbf16>, vector<8x64xf32> -> vector<8x64xf32>
    %c0_92 = arith.constant 0 : index
    %c0_93 = arith.constant 0 : index
    %388 = vector.load %arg8[%c0_92, %c0_93] : memref<1x64xf32, #tpu.memory_space<vmem>>, vector<1x64xf32>
    %389 = vector.broadcast %388 : vector<1x64xf32> to vector<8x64xf32>
    %390 = arith.addf %387, %389 : vector<8x64xf32>
    %cst_94 = arith.constant 0.000000e+00 : f32
    %391 = vector.broadcast %cst_94 : f32 to vector<8x64xf32>
    %392 = arith.maximumf %390, %391 : vector<8x64xf32>
    %393 = arith.truncf %392 : vector<8x64xf32> to vector<8x64xbf16>
    %c0_95 = arith.constant 0 : index
    %c0_96 = arith.constant 0 : index
    %394 = vector.load %arg9[%c0_95, %c0_96] : memref<64x128xbf16, #tpu.memory_space<vmem>>, vector<64x128xbf16>
    %cst_97 = arith.constant dense<0.000000e+00> : vector<8x128xf32>
    %395 = tpu.matmul %393, %394, %cst_97 {dimension_numbers = #tpu.dot_dimension_numbers<[1], [0], [0], [1], [0, 0, 1, 1], [], []>} : vector<8x64xbf16>, vector<64x128xbf16>, vector<8x128xf32> -> vector<8x128xf32>
    %c0_98 = arith.constant 0 : index
    %c0_99 = arith.constant 0 : index
    %396 = vector.load %arg10[%c0_98, %c0_99] : memref<1x128xf32, #tpu.memory_space<vmem>>, vector<1x128xf32>
    %397 = vector.broadcast %396 : vector<1x128xf32> to vector<8x128xf32>
    %398 = arith.addf %395, %397 : vector<8x128xf32>
    %c0_100 = arith.constant 0 : index
    %c0_101 = arith.constant 0 : index
    %399 = vector.load %arg11[%c0_100, %c0_101] : memref<8x128xf32, #tpu.memory_space<vmem>>, vector<8x128xf32>
    tpu.vector_store %arg11[%c0_100, %c0_101], %398 {strides = array<i32>} : memref<8x128xf32, #tpu.memory_space<vmem>>, vector<8x128xf32>,
    return
  }
}

</mosaic_0001>

<llo_original>
// kernel: lstm_net_forward.1
$region0: #{lstm_net_forward.1}
  #allocation0 [shape = 'u32[]', space=smem, size = 0x4, offset = 0x4, fixed_abs, tag = 'smem constant byte address 0x4 - core index']
  #allocation1 [shape = 'u32[72,128]{1,0:T(1,128)}', space=vmem, size = 0x9000, scoped, tag = 'internal scratch']
  %s0 = inlined_call_operand.vmem [shape: f32[64,16], index: 0, kind: input, shape index: {}]
  %s1 = inlined_call_operand.vmem [shape: bf16[16,128], index: 1, kind: input, shape index: {}]
  %s2 = inlined_call_operand.vmem [shape: bf16[32,128], index: 2, kind: input, shape index: {}]
  %s3 = inlined_call_operand.vmem [shape: f32[1,128], index: 3, kind: input, shape index: {}]
  %s4 = inlined_call_operand.vmem [shape: bf16[32,128], index: 4, kind: input, shape index: {}]
  %s5 = inlined_call_operand.vmem [shape: bf16[32,128], index: 5, kind: input, shape index: {}]
  %s6 = inlined_call_operand.vmem [shape: f32[1,128], index: 6, kind: input, shape index: {}]
  %s7 = inlined_call_operand.vmem [shape: bf16[32,64], index: 7, kind: input, shape index: {}]
  %s8 = inlined_call_operand.vmem [shape: f32[1,64], index: 8, kind: input, shape index: {}]
  %s9 = inlined_call_operand.vmem [shape: bf16[64,128], index: 9, kind: input, shape index: {}]
  %s10 = inlined_call_operand.vmem [shape: f32[1,128], index: 10, kind: input, shape index: {}]
  %s11 = inlined_call_operand.vmem [shape: f32[8,128], index: 11, kind: output, shape index: {}]
  %s12 = sld [smem:[#allocation0]]
  $region54: #{lstm_net_forward.1} parent=0
    _
  %s14 = ssub.s32 1, %s12
  %s15 = scalar_select 0, %s14, %s12
  // Predicated region
  $region2: #{lstm_net_forward.1} parent=0 // pred_check
    _
  $region3: #{lstm_net_forward.1} parent=0 // pred_check_branch
    %17 = sbr.rel (0) target = $region5
  $region4: #{lstm_net_forward.1} parent=0 // pred_region
    _
  $region5: #{lstm_net_forward.1} parent=0 // pred_fallthru
    _
  // Predicated region
  $region6: #{lstm_net_forward.1} parent=0 // pred_check
    _
  $region7: #{lstm_net_forward.1} parent=0 // pred_check_branch
    %19 = sbr.rel (0) target = $region9
  $region8: #{lstm_net_forward.1} parent=0 // pred_region
    _
  $region9: #{lstm_net_forward.1} parent=0 // pred_fallthru
    _
  // Predicated region
  $region10: #{lstm_net_forward.1} parent=0 // pred_check
    _
  $region11: #{lstm_net_forward.1} parent=0 // pred_check_branch
    %21 = sbr.rel (0) target = $region13
  $region12: #{lstm_net_forward.1} parent=0 // pred_region
    _
  $region13: #{lstm_net_forward.1} parent=0 // pred_fallthru
    _
  // Predicated region
  $region14: #{lstm_net_forward.1} parent=0 // pred_check
    _
  $region15: #{lstm_net_forward.1} parent=0 // pred_check_branch
    %23 = sbr.rel (0) target = $region17
  $region16: #{lstm_net_forward.1} parent=0 // pred_region
    _
  $region17: #{lstm_net_forward.1} parent=0 // pred_fallthru
    _
  // Predicated region
  $region18: #{lstm_net_forward.1} parent=0 // pred_check
    _
  $region19: #{lstm_net_forward.1} parent=0 // pred_check_branch
    %25 = sbr.rel (0) target = $region21
  $region20: #{lstm_net_forward.1} parent=0 // pred_region
    _
  $region21: #{lstm_net_forward.1} parent=0 // pred_fallthru
    _
  // Predicated region
  $region22: #{lstm_net_forward.1} parent=0 // pred_check
    _
  $region23: #{lstm_net_forward.1} parent=0 // pred_check_branch
    %27 = sbr.rel (0) target = $region25
  $region24: #{lstm_net_forward.1} parent=0 // pred_region
    _
  $region25: #{lstm_net_forward.1} parent=0 // pred_fallthru
    _
  // Predicated region
  $region26: #{lstm_net_forward.1} parent=0 // pred_check
    _
  $region27: #{lstm_net_forward.1} parent=0 // pred_check_branch
    %29 = sbr.rel (0) target = $region29
  $region28: #{lstm_net_forward.1} parent=0 // pred_region
    _
  $region29: #{lstm_net_forward.1} parent=0 // pred_fallthru
    _
  // Predicated region
  $region30: #{lstm_net_forward.1} parent=0 // pred_check
    _
  $region31: #{lstm_net_forward.1} parent=0 // pred_check_branch
    %31 = sbr.rel (0) target = $region33
  $region32: #{lstm_net_forward.1} parent=0 // pred_region
    _
  $region33: #{lstm_net_forward.1} parent=0 // pred_fallthru
    _
  // Predicated region
  $region34: #{lstm_net_forward.1} parent=0 // pred_check
    _
  $region35: #{lstm_net_forward.1} parent=0 // pred_check_branch
    %33 = sbr.rel (0) target = $region37
  $region36: #{lstm_net_forward.1} parent=0 // pred_region
    _
  $region37: #{lstm_net_forward.1} parent=0 // pred_fallthru
    _
  // Predicated region
  $region38: #{lstm_net_forward.1} parent=0 // pred_check
    _
  $region39: #{lstm_net_forward.1} parent=0 // pred_check_branch
    %35 = sbr.rel (0) target = $region41
  $region40: #{lstm_net_forward.1} parent=0 // pred_region
    _
  $region41: #{lstm_net_forward.1} parent=0 // pred_fallthru
    _
  // Predicated region
  $region42: #{lstm_net_forward.1} parent=0 // pred_check
    _
  $region43: #{lstm_net_forward.1} parent=0 // pred_check_branch
    %37 = sbr.rel (0) target = $region45
  $region44: #{lstm_net_forward.1} parent=0 // pred_region
    _
  $region45: #{lstm_net_forward.1} parent=0 // pred_fallthru
    _
  %v39 = vld [vmem:[%s1] sm:$0xf]
  %v40 = vld [vmem:[%s1 + $0x4] sm:$0xf]
  %v41 = vld [vmem:[%s4] sm:$0xf]
  %v42 = vld [vmem:[%s4 + $0x4] sm:$0xf]
  %v43 = vld [vmem:[%s4 + $0x8] sm:$0xf]
  %v44 = vld [vmem:[%s4 + $0xc] sm:$0xf]
  %v45 = vld [vmem:[%s2] sm:$0xf]
  %v46 = vld [vmem:[%s2 + $0x4] sm:$0xf]
  %v47 = vld [vmem:[%s2 + $0x8] sm:$0xf]
  %v48 = vld [vmem:[%s2 + $0xc] sm:$0xf]
  %v49 = vld [vmem:[%s5] sm:$0xf]
  %v50 = vld [vmem:[%s5 + $0x4] sm:$0xf]
  %v51 = vld [vmem:[%s5 + $0x8] sm:$0xf]
  %v52 = vld [vmem:[%s5 + $0xc] sm:$0xf]
  %v53 = vld [vmem:[%s3] sm:$0x1]
  %v54 = vld [vmem:[%s6] sm:$0x1]
  %v56 = vperm.slane %v54, 0
  %v58 = vld [vmem:[%s0] sm:$0xff]
  %v59 = vld [vmem:[%s0 + $0x8] sm:$0xff]
  %v60 = vld [vmem:[%s0 + $0x10] sm:$0xff]
  %v61 = vld [vmem:[%s0 + $0x18] sm:$0xff]
  %v62 = vld [vmem:[%s0 + $0x20] sm:$0xff]
  %v63 = vld [vmem:[%s0 + $0x28] sm:$0xff]
  %v64 = vld [vmem:[%s0 + $0x30] sm:$0xff]
  %v65 = vld [vmem:[%s0 + $0x38] sm:$0xff]
  %v66 = vpack.c.bf16 %v59, %v58
  %v67 = vpack.c.bf16 %v61, %v60
  %v68 = vpack.c.bf16 %v63, %v62
  %v69 = vpack.c.bf16 %v65, %v64
  %v71 = vperm.slane %v53, 0
  %v75 = vunpack.c.l.b16 %v39
  %v76 = vunpack.c.l.b16 %v40
  %v77 = vpack.c.b16 %v76, %v75
  %vm79 = vcmask 130048
  %v81 = vsel %vm79, %v66, 0
  %v84 = vsel %vm79, %v67, 0
  %v87 = vsel %vm79, %v68, 0
  %v90 = vsel %vm79, %v69, 0
  %92 = vmatpush.bf16.msra.mxu0 0
  %93 = vmatpush.bf16.msra.mxu0 0
  %94 = vmatpush.bf16.msra.mxu0 0
  %95 = vmatpush.bf16.msra.mxu0 0
  %96 = vmatpush.bf16.msra.mxu0 0
  %97 = vmatpush.bf16.msra.mxu0 0
  %98 = vmatpush.bf16.msra.mxu0 0
  %99 = vmatpush.bf16.msra.mxu0 %v77
  %100 = vmatmul.bf16.gmra.mxu0 %v81
  %v101 = vpop.f32.mrf.mxu0
  %v102 = vadd.f32 %v71, %v101
  %v103 = vpop.f32.mrf.mxu0
  %v104 = vadd.f32 %v71, %v103
  %105 = vmatmul.bf16.gmra.mxu0 %v84
  %v106 = vpop.f32.mrf.mxu0
  %v107 = vadd.f32 %v71, %v106
  %v108 = vpop.f32.mrf.mxu0
  %v109 = vadd.f32 %v71, %v108
  %110 = vmatmul.bf16.gmra.mxu0 %v87
  %v111 = vpop.f32.mrf.mxu0
  %v112 = vadd.f32 %v71, %v111
  %v113 = vpop.f32.mrf.mxu0
  %v114 = vadd.f32 %v71, %v113
  %115 = vmatmul.bf16.gmra.mxu0 %v90
  %v116 = vpop.f32.mrf.mxu0
  %v117 = vadd.f32 %v71, %v116
  %v118 = vpop.f32.mrf.mxu0
  %v119 = vadd.f32 %v71, %v118
  %120 = vdwg.mxu0
  %v125 = vunpack.c.l.b16 %v45
  %v126 = vunpack.c.l.b16 %v46
  %v127 = vunpack.c.l.b16 %v47
  %v128 = vunpack.c.l.b16 %v48
  %v129 = vpack.c.b16 %v126, %v125
  %v130 = vpack.c.b16 %v128, %v127
  %vm133 = vcmask 261120
  %v135 = vsel %vm133, 0, 0
  %137 = vmatpush.bf16.msra.mxu0 0
  %138 = vmatpush.bf16.msra.mxu0 0
  %139 = vmatpush.bf16.msra.mxu0 0
  %140 = vmatpush.bf16.msra.mxu0 0
  %141 = vmatpush.bf16.msra.mxu0 0
  %142 = vmatpush.bf16.msra.mxu0 0
  %143 = vmatpush.bf16.msra.mxu0 %v130
  %144 = vmatpush.bf16.msra.mxu0 %v129
  %145 = vmatmul.bf16.gmra.mxu0 %v135
  %v146 = vpop.f32.mrf.mxu0
  %v147 = vadd.f32 0.0, %v146
  %v148 = vpop.f32.mrf.mxu0
  %149 = vdwg.mxu0
  %v150 = vadd.f32 %v102, %v147
  %v151 = vxor.u32 %v150, 2147483648
  %v152 = vmul.f32 %v151, 1.442695
  %v153 = vpow.pop %v152
  %v154 = vadd.f32 %v153, 1.0
  %v155 = vrcp.pop %v154
  %v156 = vmul.f32 %v154, %v155
  %v157 = vsub.f32 1.0, %v156
  %v158 = vmul.f32 %v155, %v157
  %v159 = vadd.f32 %v155, %v158
  %vm160 = vweird.f32 %v154
  %vm161 = vweird.f32 %v155
  %vm162 = vmor %vm160, %vm161
  %v163 = vsel %vm162, %v155, %v159
  %v164 = vand.u32 2147483647, %v154
  %vm165 = vcmp.eq.f32.partialorder %v164, 8.507059e+37
  %v166 = vand.u32 %v154, 2147483648
  %v167 = vor.u32 1.1754944e-38, %v166
  %v168 = vsel %vm165, %v167, %v163
  %v169 = vmul.f32 1.0, %v168
  %v170 = vmul.f32 %v169, 2.0
  %v171 = vsub.f32 %v170, 1.0
  %v172 = vmul.f32 %v169, 0.0
  %174 = vrot.lane.b32.xlu0 %v171, 64
  %v175 = vpop.permute.xlu0 %174
  %v177 = vmul.f32 %v169, %v175
  %179 = vrot.lane.b32.xlu0 %v177, 32
  %v180 = vpop.permute.xlu0 %179
  %v182 = vadd.f32 %v172, %v180
  %v183 = vtanh.pop %v182
  %185 = vrot.lane.b32.xlu0 %v183, 64
  %v186 = vpop.permute.xlu0 %185
  %v188 = vmul.f32 %v169, %v186
  %v193 = vunpack.c.l.b16 %v49
  %v194 = vunpack.c.l.b16 %v50
  %v195 = vunpack.c.l.b16 %v51
  %v196 = vunpack.c.l.b16 %v52
  %v197 = vpack.c.b16 %v194, %v193
  %v198 = vpack.c.b16 %v196, %v195
  %201 = vmatpush.bf16.msra.mxu0 0
  %202 = vmatpush.bf16.msra.mxu0 0
  %203 = vmatpush.bf16.msra.mxu0 0
  %204 = vmatpush.bf16.msra.mxu0 0
  %205 = vmatpush.bf16.msra.mxu0 0
  %206 = vmatpush.bf16.msra.mxu0 0
  %207 = vmatpush.bf16.msra.mxu0 %v198
  %208 = vmatpush.bf16.msra.mxu0 %v197
  %209 = vmatmul.bf16.gmra.mxu0 %v135
  %v210 = vpop.f32.mrf.mxu0
  %v211 = vadd.f32 0.0, %v210
  %v212 = vpop.f32.mrf.mxu0
  %213 = vdwg.mxu0
  %v214 = vpack.c.bf16 %v188, %v188
  %216 = vrot.lane.b32.xlu0 %v214, 32
  %v217 = vpop.permute.xlu0 %216
  %v222 = vunpack.c.l.b16 %v41
  %v223 = vunpack.c.l.b16 %v42
  %v224 = vunpack.c.l.b16 %v43
  %v225 = vunpack.c.l.b16 %v44
  %v226 = vpack.c.b16 %v223, %v222
  %v227 = vpack.c.b16 %v225, %v224
  %v231 = vsel %vm133, %v217, 0
  %233 = vmatpush.bf16.msra.mxu0 0
  %234 = vmatpush.bf16.msra.mxu0 0
  %235 = vmatpush.bf16.msra.mxu0 0
  %236 = vmatpush.bf16.msra.mxu0 0
  %237 = vmatpush.bf16.msra.mxu0 0
  %238 = vmatpush.bf16.msra.mxu0 0
  %239 = vmatpush.bf16.msra.mxu0 %v227
  %240 = vmatpush.bf16.msra.mxu0 %v226
  %241 = vmatmul.bf16.gmra.mxu0 %v231
  %v242 = vpop.f32.mrf.mxu0
  %v243 = vadd.f32 %v211, %v242
  %v244 = vpop.f32.mrf.mxu0
  %245 = vdwg.mxu0
  %v246 = vadd.f32 %v243, %v56
  %v247 = vxor.u32 %v246, 2147483648
  %v248 = vmul.f32 %v247, 1.442695
  %v249 = vpow.pop %v248
  %v250 = vadd.f32 %v249, 1.0
  %v251 = vrcp.pop %v250
  %v252 = vmul.f32 %v250, %v251
  %v253 = vsub.f32 1.0, %v252
  %v254 = vmul.f32 %v251, %v253
  %v255 = vadd.f32 %v251, %v254
  %vm256 = vweird.f32 %v250
  %vm257 = vweird.f32 %v251
  %vm258 = vmor %vm256, %vm257
  %v259 = vsel %vm258, %v251, %v255
  %v260 = vand.u32 2147483647, %v250
  %vm261 = vcmp.eq.f32.partialorder %v260, 8.507059e+37
  %v262 = vand.u32 %v250, 2147483648
  %v263 = vor.u32 1.1754944e-38, %v262
  %v264 = vsel %vm261, %v263, %v259
  %v265 = vmul.f32 1.0, %v264
  %v266 = vmul.f32 %v265, 2.0
  %v267 = vsub.f32 %v266, 1.0
  %v268 = vmul.f32 %v265, 0.0
  %270 = vrot.lane.b32.xlu0 %v267, 64
  %v271 = vpop.permute.xlu0 %270
  %v273 = vmul.f32 %v265, %v271
  %275 = vrot.lane.b32.xlu0 %v273, 32
  %v276 = vpop.permute.xlu0 %275
  %v278 = vadd.f32 %v268, %v276
  %v279 = vtanh.pop %v278
  %281 = vrot.lane.b32.xlu0 %v279, 64
  %v282 = vpop.permute.xlu0 %281
  %v284 = vmul.f32 %v265, %v282
  %285 = vmatpush.bf16.msra.mxu0 0
  %286 = vmatpush.bf16.msra.mxu0 0
  %287 = vmatpush.bf16.msra.mxu0 0
  %288 = vmatpush.bf16.msra.mxu0 0
  %289 = vmatpush.bf16.msra.mxu0 0
  %290 = vmatpush.bf16.msra.mxu0 0
  %291 = vmatpush.bf16.msra.mxu0 %v130
  %292 = vmatpush.bf16.msra.mxu0 %v129
  %293 = vmatmul.bf16.gmra.mxu0 %v231
  %v294 = vpop.f32.mrf.mxu0
  %v295 = vadd.f32 0.0, %v294
  %v296 = vpop.f32.mrf.mxu0
  %297 = vdwg.mxu0
  %v298 = vadd.f32 %v104, %v295
  %v299 = vxor.u32 %v298, 2147483648
  %v300 = vmul.f32 %v299, 1.442695
  %v301 = vpow.pop %v300
  %v302 = vadd.f32 %v301, 1.0
  %v303 = vrcp.pop %v302
  %v304 = vmul.f32 %v302, %v303
  %v305 = vsub.f32 1.0, %v304
  %v306 = vmul.f32 %v303, %v305
  %v307 = vadd.f32 %v303, %v306
  %vm308 = vweird.f32 %v302
  %vm309 = vweird.f32 %v303
  %vm310 = vmor %vm308, %vm309
  %v311 = vsel %vm310, %v303, %v307
  %v312 = vand.u32 2147483647, %v302
  %vm313 = vcmp.eq.f32.partialorder %v312, 8.507059e+37
  %v314 = vand.u32 %v302, 2147483648
  %v315 = vor.u32 1.1754944e-38, %v314
  %v316 = vsel %vm313, %v315, %v311
  %v317 = vmul.f32 1.0, %v316
  %v318 = vmul.f32 %v317, 2.0
  %v319 = vsub.f32 %v318, 1.0
  %v320 = vmul.f32 %v317, %v182
  %322 = vrot.lane.b32.xlu0 %v319, 64
  %v323 = vpop.permute.xlu0 %322
  %v325 = vmul.f32 %v317, %v323
  %327 = vrot.lane.b32.xlu0 %v325, 32
  %v328 = vpop.permute.xlu0 %327
  %v330 = vadd.f32 %v320, %v328
  %v331 = vtanh.pop %v330
  %333 = vrot.lane.b32.xlu0 %v331, 64
  %v334 = vpop.permute.xlu0 %333
  %v336 = vmul.f32 %v317, %v334
  %v337 = vpack.c.bf16 %v284, %v284
  %339 = vrot.lane.b32.xlu0 %v337, 32
  %v340 = vpop.permute.xlu0 %339
  %v342 = vsel %vm133, %v340, 0
  %344 = vmatpush.bf16.msra.mxu0 0
  %345 = vmatpush.bf16.msra.mxu0 0
  %346 = vmatpush.bf16.msra.mxu0 0
  %347 = vmatpush.bf16.msra.mxu0 0
  %348 = vmatpush.bf16.msra.mxu0 0
  %349 = vmatpush.bf16.msra.mxu0 0
  %350 = vmatpush.bf16.msra.mxu0 %v198
  %351 = vmatpush.bf16.msra.mxu0 %v197
  %352 = vmatmul.bf16.gmra.mxu0 %v342
  %v353 = vpop.f32.mrf.mxu0
  %v354 = vadd.f32 0.0, %v353
  %v355 = vpop.f32.mrf.mxu0
  %356 = vdwg.mxu0
  %v357 = vpack.c.bf16 %v336, %v336
  %359 = vrot.lane.b32.xlu0 %v357, 32
  %v360 = vpop.permute.xlu0 %359
  %v362 = vsel %vm133, %v360, 0
  %364 = vmatpush.bf16.msra.mxu0 0
  %365 = vmatpush.bf16.msra.mxu0 0
  %366 = vmatpush.bf16.msra.mxu0 0
  %367 = vmatpush.bf16.msra.mxu0 0
  %368 = vmatpush.bf16.msra.mxu0 0
  %369 = vmatpush.bf16.msra.mxu0 0
  %370 = vmatpush.bf16.msra.mxu0 %v227
  %371 = vmatpush.bf16.msra.mxu0 %v226
  %372 = vmatmul.bf16.gmra.mxu0 %v362
  %v373 = vpop.f32.mrf.mxu0
  %v374 = vadd.f32 %v354, %v373
  %v375 = vpop.f32.mrf.mxu0
  %376 = vdwg.mxu0
  %v377 = vadd.f32 %v374, %v56
  %v378 = vxor.u32 %v377, 2147483648
  %v379 = vmul.f32 %v378, 1.442695
  %v380 = vpow.pop %v379
  %v381 = vadd.f32 %v380, 1.0
  %v382 = vrcp.pop %v381
  %v383 = vmul.f32 %v381, %v382
  %v384 = vsub.f32 1.0, %v383
  %v385 = vmul.f32 %v382, %v384
  %v386 = vadd.f32 %v382, %v385
  %vm387 = vweird.f32 %v381
  %vm388 = vweird.f32 %v382
  %vm389 = vmor %vm387, %vm388
  %v390 = vsel %vm389, %v382, %v386
  %v391 = vand.u32 2147483647, %v381
  %vm392 = vcmp.eq.f32.partialorder %v391, 8.507059e+37
  %v393 = vand.u32 %v381, 2147483648
  %v394 = vor.u32 1.1754944e-38, %v393
  %v395 = vsel %vm392, %v394, %v390
  %v396 = vmul.f32 1.0, %v395
  %v397 = vmul.f32 %v396, 2.0
  %v398 = vsub.f32 %v397, 1.0
  %v399 = vmul.f32 %v396, %v278
  %401 = vrot.lane.b32.xlu0 %v398, 64
  %v402 = vpop.permute.xlu0 %401
  %v404 = vmul.f32 %v396, %v402
  %406 = vrot.lane.b32.xlu0 %v404, 32
  %v407 = vpop.permute.xlu0 %406
  %v409 = vadd.f32 %v399, %v407
  %v410 = vtanh.pop %v409
  %412 = vrot.lane.b32.xlu0 %v410, 64
  %v413 = vpop.permute.xlu0 %412
  %v415 = vmul.f32 %v396, %v413
  %416 = vmatpush.bf16.msra.mxu0 0
  %417 = vmatpush.bf16.msra.mxu0 0
  %418 = vmatpush.bf16.msra.mxu0 0
  %419 = vmatpush.bf16.msra.mxu0 0
  %420 = vmatpush.bf16.msra.mxu0 0
  %421 = vmatpush.bf16.msra.mxu0 0
  %422 = vmatpush.bf16.msra.mxu0 %v130
  %423 = vmatpush.bf16.msra.mxu0 %v129
  %424 = vmatmul.bf16.gmra.mxu0 %v362
  %v425 = vpop.f32.mrf.mxu0
  %v426 = vadd.f32 0.0, %v425
  %v427 = vpop.f32.mrf.mxu0
  %428 = vdwg.mxu0
  %v429 = vadd.f32 %v107, %v426
  %v430 = vxor.u32 %v429, 2147483648
  %v431 = vmul.f32 %v430, 1.442695
  %v432 = vpow.pop %v431
  %v433 = vadd.f32 %v432, 1.0
  %v434 = vrcp.pop %v433
  %v435 = vmul.f32 %v433, %v434
  %v436 = vsub.f32 1.0, %v435
  %v437 = vmul.f32 %v434, %v436
  %v438 = vadd.f32 %v434, %v437
  %vm439 = vweird.f32 %v433
  %vm440 = vweird.f32 %v434
  %vm441 = vmor %vm439, %vm440
  %v442 = vsel %vm441, %v434, %v438
  %v443 = vand.u32 2147483647, %v433
  %vm444 = vcmp.eq.f32.partialorder %v443, 8.507059e+37
  %v445 = vand.u32 %v433, 2147483648
  %v446 = vor.u32 1.1754944e-38, %v445
  %v447 = vsel %vm444, %v446, %v442
  %v448 = vmul.f32 1.0, %v447
  %v449 = vmul.f32 %v448, 2.0
  %v450 = vsub.f32 %v449, 1.0
  %v451 = vmul.f32 %v448, %v330
  %453 = vrot.lane.b32.xlu0 %v450, 64
  %v454 = vpop.permute.xlu0 %453
  %v456 = vmul.f32 %v448, %v454
  %458 = vrot.lane.b32.xlu0 %v456, 32
  %v459 = vpop.permute.xlu0 %458
  %v461 = vadd.f32 %v451, %v459
  %v462 = vtanh.pop %v461
  %464 = vrot.lane.b32.xlu0 %v462, 64
  %v465 = vpop.permute.xlu0 %464
  %v467 = vmul.f32 %v448, %v465
  %v468 = vpack.c.bf16 %v415, %v415
  %470 = vrot.lane.b32.xlu0 %v468, 32
  %v471 = vpop.permute.xlu0 %470
  %v473 = vsel %vm133, %v471, 0
  %475 = vmatpush.bf16.msra.mxu0 0
  %476 = vmatpush.bf16.msra.mxu0 0
  %477 = vmatpush.bf16.msra.mxu0 0
  %478 = vmatpush.bf16.msra.mxu0 0
  %479 = vmatpush.bf16.msra.mxu0 0
  %480 = vmatpush.bf16.msra.mxu0 0
  %481 = vmatpush.bf16.msra.mxu0 %v198
  %482 = vmatpush.bf16.msra.mxu0 %v197
  %483 = vmatmul.bf16.gmra.mxu0 %v473
  %v484 = vpop.f32.mrf.mxu0
  %v485 = vadd.f32 0.0, %v484
  %v486 = vpop.f32.mrf.mxu0
  %487 = vdwg.mxu0
  %v488 = vpack.c.bf16 %v467, %v467
  %490 = vrot.lane.b32.xlu0 %v488, 32
  %v491 = vpop.permute.xlu0 %490
  %v493 = vsel %vm133, %v491, 0
  %495 = vmatpush.bf16.msra.mxu0 0
  %496 = vmatpush.bf16.msra.mxu0 0
  %497 = vmatpush.bf16.msra.mxu0 0
  %498 = vmatpush.bf16.msra.mxu0 0
  %499 = vmatpush.bf16.msra.mxu0 0
  %500 = vmatpush.bf16.msra.mxu0 0
  %501 = vmatpush.bf16.msra.mxu0 %v227
  %502 = vmatpush.bf16.msra.mxu0 %v226
  %503 = vmatmul.bf16.gmra.mxu0 %v493
  %v504 = vpop.f32.mrf.mxu0
  %v505 = vadd.f32 %v485, %v504
  %v506 = vpop.f32.mrf.mxu0
  %507 = vdwg.mxu0
  %v508 = vadd.f32 %v505, %v56
  %v509 = vxor.u32 %v508, 2147483648
  %v510 = vmul.f32 %v509, 1.442695
  %v511 = vpow.pop %v510
  %v512 = vadd.f32 %v511, 1.0
  %v513 = vrcp.pop %v512
  %v514 = vmul.f32 %v512, %v513
  %v515 = vsub.f32 1.0, %v514
  %v516 = vmul.f32 %v513, %v515
  %v517 = vadd.f32 %v513, %v516
  %vm518 = vweird.f32 %v512
  %vm519 = vweird.f32 %v513
  %vm520 = vmor %vm518, %vm519
  %v521 = vsel %vm520, %v513, %v517
  %v522 = vand.u32 2147483647, %v512
  %vm523 = vcmp.eq.f32.partialorder %v522, 8.507059e+37
  %v524 = vand.u32 %v512, 2147483648
  %v525 = vor.u32 1.1754944e-38, %v524
  %v526 = vsel %vm523, %v525, %v521
  %v527 = vmul.f32 1.0, %v526
  %v528 = vmul.f32 %v527, 2.0
  %v529 = vsub.f32 %v528, 1.0
  %v530 = vmul.f32 %v527, %v409
  %532 = vrot.lane.b32.xlu0 %v529, 64
  %v533 = vpop.permute.xlu0 %532
  %v535 = vmul.f32 %v527, %v533
  %537 = vrot.lane.b32.xlu0 %v535, 32
  %v538 = vpop.permute.xlu0 %537
  %v540 = vadd.f32 %v530, %v538
  %v541 = vtanh.pop %v540
  %543 = vrot.lane.b32.xlu0 %v541, 64
  %v544 = vpop.permute.xlu0 %543
  %v546 = vmul.f32 %v527, %v544
  %547 = vmatpush.bf16.msra.mxu0 0
  %548 = vmatpush.bf16.msra.mxu0 0
  %549 = vmatpush.bf16.msra.mxu0 0
  %550 = vmatpush.bf16.msra.mxu0 0
  %551 = vmatpush.bf16.msra.mxu0 0
  %552 = vmatpush.bf16.msra.mxu0 0
  %553 = vmatpush.bf16.msra.mxu0 %v130
  %554 = vmatpush.bf16.msra.mxu0 %v129
  %555 = vmatmul.bf16.gmra.mxu0 %v493
  %v556 = vpop.f32.mrf.mxu0
  %v557 = vadd.f32 0.0, %v556
  %v558 = vpop.f32.mrf.mxu0
  %559 = vdwg.mxu0
  %v560 = vadd.f32 %v109, %v557
  %v561 = vxor.u32 %v560, 2147483648
  %v562 = vmul.f32 %v561, 1.442695
  %v563 = vpow.pop %v562
  %v564 = vadd.f32 %v563, 1.0
  %v565 = vrcp.pop %v564
  %v566 = vmul.f32 %v564, %v565
  %v567 = vsub.f32 1.0, %v566
  %v568 = vmul.f32 %v565, %v567
  %v569 = vadd.f32 %v565, %v568
  %vm570 = vweird.f32 %v564
  %vm571 = vweird.f32 %v565
  %vm572 = vmor %vm570, %vm571
  %v573 = vsel %vm572, %v565, %v569
  %v574 = vand.u32 2147483647, %v564
  %vm575 = vcmp.eq.f32.partialorder %v574, 8.507059e+37
  %v576 = vand.u32 %v564, 2147483648
  %v577 = vor.u32 1.1754944e-38, %v576
  %v578 = vsel %vm575, %v577, %v573
  %v579 = vmul.f32 1.0, %v578
  %v580 = vmul.f32 %v579, 2.0
  %v581 = vsub.f32 %v580, 1.0
  %v582 = vmul.f32 %v579, %v461
  %584 = vrot.lane.b32.xlu0 %v581, 64
  %v585 = vpop.permute.xlu0 %584
  %v587 = vmul.f32 %v579, %v585
  %589 = vrot.lane.b32.xlu0 %v587, 32
  %v590 = vpop.permute.xlu0 %589
  %v592 = vadd.f32 %v582, %v590
  %v593 = vtanh.pop %v592
  %595 = vrot.lane.b32.xlu0 %v593, 64
  %v596 = vpop.permute.xlu0 %595
  %v598 = vmul.f32 %v579, %v596
  %v599 = vpack.c.bf16 %v546, %v546
  %601 = vrot.lane.b32.xlu0 %v599, 32
  %v602 = vpop.permute.xlu0 %601
  %v604 = vsel %vm133, %v602, 0
  %606 = vmatpush.bf16.msra.mxu0 0
  %607 = vmatpush.bf16.msra.mxu0 0
  %608 = vmatpush.bf16.msra.mxu0 0
  %609 = vmatpush.bf16.msra.mxu0 0
  %610 = vmatpush.bf16.msra.mxu0 0
  %611 = vmatpush.bf16.msra.mxu0 0
  %612 = vmatpush.bf16.msra.mxu0 %v198
  %613 = vmatpush.bf16.msra.mxu0 %v197
  %614 = vmatmul.bf16.gmra.mxu0 %v604
  %v615 = vpop.f32.mrf.mxu0
  %v616 = vadd.f32 0.0, %v615
  %v617 = vpop.f32.mrf.mxu0
  %618 = vdwg.mxu0
  %v619 = vpack.c.bf16 %v598, %v598
  %621 = vrot.lane.b32.xlu0 %v619, 32
  %v622 = vpop.permute.xlu0 %621
  %v624 = vsel %vm133, %v622, 0
  %626 = vmatpush.bf16.msra.mxu0 0
  %627 = vmatpush.bf16.msra.mxu0 0
  %628 = vmatpush.bf16.msra.mxu0 0
  %629 = vmatpush.bf16.msra.mxu0 0
  %630 = vmatpush.bf16.msra.mxu0 0
  %631 = vmatpush.bf16.msra.mxu0 0
  %632 = vmatpush.bf16.msra.mxu0 %v227
  %633 = vmatpush.bf16.msra.mxu0 %v226
  %634 = vmatmul.bf16.gmra.mxu0 %v624
  %v635 = vpop.f32.mrf.mxu0
  %v636 = vadd.f32 %v616, %v635
  %v637 = vpop.f32.mrf.mxu0
  %638 = vdwg.mxu0
  %v639 = vadd.f32 %v636, %v56
  %v640 = vxor.u32 %v639, 2147483648
  %v641 = vmul.f32 %v640, 1.442695
  %v642 = vpow.pop %v641
  %v643 = vadd.f32 %v642, 1.0
  %v644 = vrcp.pop %v643
  %v645 = vmul.f32 %v643, %v644
  %v646 = vsub.f32 1.0, %v645
  %v647 = vmul.f32 %v644, %v646
  %v648 = vadd.f32 %v644, %v647
  %vm649 = vweird.f32 %v643
  %vm650 = vweird.f32 %v644
  %vm651 = vmor %vm649, %vm650
  %v652 = vsel %vm651, %v644, %v648
  %v653 = vand.u32 2147483647, %v643
  %vm654 = vcmp.eq.f32.partialorder %v653, 8.507059e+37
  %v655 = vand.u32 %v643, 2147483648
  %v656 = vor.u32 1.1754944e-38, %v655
  %v657 = vsel %vm654, %v656, %v652
  %v658 = vmul.f32 1.0, %v657
  %v659 = vmul.f32 %v658, 2.0
  %v660 = vsub.f32 %v659, 1.0
  %v661 = vmul.f32 %v658, %v540
  %663 = vrot.lane.b32.xlu0 %v660, 64
  %v664 = vpop.permute.xlu0 %663
  %v666 = vmul.f32 %v658, %v664
  %668 = vrot.lane.b32.xlu0 %v666, 32
  %v669 = vpop.permute.xlu0 %668
  %v671 = vadd.f32 %v661, %v669
  %v672 = vtanh.pop %v671
  %674 = vrot.lane.b32.xlu0 %v672, 64
  %v675 = vpop.permute.xlu0 %674
  %v677 = vmul.f32 %v658, %v675
  %678 = vmatpush.bf16.msra.mxu0 0
  %679 = vmatpush.bf16.msra.mxu0 0
  %680 = vmatpush.bf16.msra.mxu0 0
  %681 = vmatpush.bf16.msra.mxu0 0
  %682 = vmatpush.bf16.msra.mxu0 0
  %683 = vmatpush.bf16.msra.mxu0 0
  %684 = vmatpush.bf16.msra.mxu0 %v130
  %685 = vmatpush.bf16.msra.mxu0 %v129
  %686 = vmatmul.bf16.gmra.mxu0 %v624
  %v687 = vpop.f32.mrf.mxu0
  %v688 = vadd.f32 0.0, %v687
  %v689 = vpop.f32.mrf.mxu0
  %690 = vdwg.mxu0
  %v691 = vadd.f32 %v112, %v688
  %v692 = vxor.u32 %v691, 2147483648
  %v693 = vmul.f32 %v692, 1.442695
  %v694 = vpow.pop %v693
  %v695 = vadd.f32 %v694, 1.0
  %v696 = vrcp.pop %v695
  %v697 = vmul.f32 %v695, %v696
  %v698 = vsub.f32 1.0, %v697
  %v699 = vmul.f32 %v696, %v698
  %v700 = vadd.f32 %v696, %v699
  %vm701 = vweird.f32 %v695
  %vm702 = vweird.f32 %v696
  %vm703 = vmor %vm701, %vm702
  %v704 = vsel %vm703, %v696, %v700
  %v705 = vand.u32 2147483647, %v695
  %vm706 = vcmp.eq.f32.partialorder %v705, 8.507059e+37
  %v707 = vand.u32 %v695, 2147483648
  %v708 = vor.u32 1.1754944e-38, %v707
  %v709 = vsel %vm706, %v708, %v704
  %v710 = vmul.f32 1.0, %v709
  %v711 = vmul.f32 %v710, 2.0
  %v712 = vsub.f32 %v711, 1.0
  %v713 = vmul.f32 %v710, %v592
  %715 = vrot.lane.b32.xlu0 %v712, 64
  %v716 = vpop.permute.xlu0 %715
  %v718 = vmul.f32 %v710, %v716
  %720 = vrot.lane.b32.xlu0 %v718, 32
  %v721 = vpop.permute.xlu0 %720
  %v723 = vadd.f32 %v713, %v721
  %v724 = vtanh.pop %v723
  %726 = vrot.lane.b32.xlu0 %v724, 64
  %v727 = vpop.permute.xlu0 %726
  %v729 = vmul.f32 %v710, %v727
  %v730 = vpack.c.bf16 %v677, %v677
  %732 = vrot.lane.b32.xlu0 %v730, 32
  %v733 = vpop.permute.xlu0 %732
  %v735 = vsel %vm133, %v733, 0
  %737 = vmatpush.bf16.msra.mxu0 0
  %738 = vmatpush.bf16.msra.mxu0 0
  %739 = vmatpush.bf16.msra.mxu0 0
  %740 = vmatpush.bf16.msra.mxu0 0
  %741 = vmatpush.bf16.msra.mxu0 0
  %742 = vmatpush.bf16.msra.mxu0 0
  %743 = vmatpush.bf16.msra.mxu0 %v198
  %744 = vmatpush.bf16.msra.mxu0 %v197
  %745 = vmatmul.bf16.gmra.mxu0 %v735
  %v746 = vpop.f32.mrf.mxu0
  %v747 = vadd.f32 0.0, %v746
  %v748 = vpop.f32.mrf.mxu0
  %749 = vdwg.mxu0
  %v750 = vpack.c.bf16 %v729, %v729
  %752 = vrot.lane.b32.xlu0 %v750, 32
  %v753 = vpop.permute.xlu0 %752
  %v755 = vsel %vm133, %v753, 0
  %757 = vmatpush.bf16.msra.mxu0 0
  %758 = vmatpush.bf16.msra.mxu0 0
  %759 = vmatpush.bf16.msra.mxu0 0
  %760 = vmatpush.bf16.msra.mxu0 0
  %761 = vmatpush.bf16.msra.mxu0 0
  %762 = vmatpush.bf16.msra.mxu0 0
  %763 = vmatpush.bf16.msra.mxu0 %v227
  %764 = vmatpush.bf16.msra.mxu0 %v226
  %765 = vmatmul.bf16.gmra.mxu0 %v755
  %v766 = vpop.f32.mrf.mxu0
  %v767 = vadd.f32 %v747, %v766
  %v768 = vpop.f32.mrf.mxu0
  %769 = vdwg.mxu0
  %v770 = vadd.f32 %v767, %v56
  %v771 = vxor.u32 %v770, 2147483648
  %v772 = vmul.f32 %v771, 1.442695
  %v773 = vpow.pop %v772
  %v774 = vadd.f32 %v773, 1.0
  %v775 = vrcp.pop %v774
  %v776 = vmul.f32 %v774, %v775
  %v777 = vsub.f32 1.0, %v776
  %v778 = vmul.f32 %v775, %v777
  %v779 = vadd.f32 %v775, %v778
  %vm780 = vweird.f32 %v774
  %vm781 = vweird.f32 %v775
  %vm782 = vmor %vm780, %vm781
  %v783 = vsel %vm782, %v775, %v779
  %v784 = vand.u32 2147483647, %v774
  %vm785 = vcmp.eq.f32.partialorder %v784, 8.507059e+37
  %v786 = vand.u32 %v774, 2147483648
  %v787 = vor.u32 1.1754944e-38, %v786
  %v788 = vsel %vm785, %v787, %v783
  %v789 = vmul.f32 1.0, %v788
  %v790 = vmul.f32 %v789, 2.0
  %v791 = vsub.f32 %v790, 1.0
  %v792 = vmul.f32 %v789, %v671
  %794 = vrot.lane.b32.xlu0 %v791, 64
  %v795 = vpop.permute.xlu0 %794
  %v797 = vmul.f32 %v789, %v795
  %799 = vrot.lane.b32.xlu0 %v797, 32
  %v800 = vpop.permute.xlu0 %799
  %v802 = vadd.f32 %v792, %v800
  %v803 = vtanh.pop %v802
  %805 = vrot.lane.b32.xlu0 %v803, 64
  %v806 = vpop.permute.xlu0 %805
  %v808 = vmul.f32 %v789, %v806
  %809 = vmatpush.bf16.msra.mxu0 0
  %810 = vmatpush.bf16.msra.mxu0 0
  %811 = vmatpush.bf16.msra.mxu0 0
  %812 = vmatpush.bf16.msra.mxu0 0
  %813 = vmatpush.bf16.msra.mxu0 0
  %814 = vmatpush.bf16.msra.mxu0 0
  %815 = vmatpush.bf16.msra.mxu0 %v130
  %816 = vmatpush.bf16.msra.mxu0 %v129
  %817 = vmatmul.bf16.gmra.mxu0 %v755
  %v818 = vpop.f32.mrf.mxu0
  %v819 = vadd.f32 0.0, %v818
  %v820 = vpop.f32.mrf.mxu0
  %821 = vdwg.mxu0
  %v822 = vadd.f32 %v114, %v819
  %v823 = vxor.u32 %v822, 2147483648
  %v824 = vmul.f32 %v823, 1.442695
  %v825 = vpow.pop %v824
  %v826 = vadd.f32 %v825, 1.0
  %v827 = vrcp.pop %v826
  %v828 = vmul.f32 %v826, %v827
  %v829 = vsub.f32 1.0, %v828
  %v830 = vmul.f32 %v827, %v829
  %v831 = vadd.f32 %v827, %v830
  %vm832 = vweird.f32 %v826
  %vm833 = vweird.f32 %v827
  %vm834 = vmor %vm832, %vm833
  %v835 = vsel %vm834, %v827, %v831
  %v836 = vand.u32 2147483647, %v826
  %vm837 = vcmp.eq.f32.partialorder %v836, 8.507059e+37
  %v838 = vand.u32 %v826, 2147483648
  %v839 = vor.u32 1.1754944e-38, %v838
  %v840 = vsel %vm837, %v839, %v835
  %v841 = vmul.f32 1.0, %v840
  %v842 = vmul.f32 %v841, 2.0
  %v843 = vsub.f32 %v842, 1.0
  %v844 = vmul.f32 %v841, %v723
  %846 = vrot.lane.b32.xlu0 %v843, 64
  %v847 = vpop.permute.xlu0 %846
  %v849 = vmul.f32 %v841, %v847
  %851 = vrot.lane.b32.xlu0 %v849, 32
  %v852 = vpop.permute.xlu0 %851
  %v854 = vadd.f32 %v844, %v852
  %v855 = vtanh.pop %v854
  %857 = vrot.lane.b32.xlu0 %v855, 64
  %v858 = vpop.permute.xlu0 %857
  %v860 = vmul.f32 %v841, %v858
  %v861 = vpack.c.bf16 %v808, %v808
  %863 = vrot.lane.b32.xlu0 %v861, 32
  %v864 = vpop.permute.xlu0 %863
  %v866 = vsel %vm133, %v864, 0
  %868 = vmatpush.bf16.msra.mxu0 0
  %869 = vmatpush.bf16.msra.mxu0 0
  %870 = vmatpush.bf16.msra.mxu0 0
  %871 = vmatpush.bf16.msra.mxu0 0
  %872 = vmatpush.bf16.msra.mxu0 0
  %873 = vmatpush.bf16.msra.mxu0 0
  %874 = vmatpush.bf16.msra.mxu0 %v198
  %875 = vmatpush.bf16.msra.mxu0 %v197
  %876 = vmatmul.bf16.gmra.mxu0 %v866
  %v877 = vpop.f32.mrf.mxu0
  %v878 = vadd.f32 0.0, %v877
  %v879 = vpop.f32.mrf.mxu0
  %880 = vdwg.mxu0
  %v881 = vpack.c.bf16 %v860, %v860
  %883 = vrot.lane.b32.xlu0 %v881, 32
  %v884 = vpop.permute.xlu0 %883
  %v886 = vsel %vm133, %v884, 0
  %888 = vmatpush.bf16.msra.mxu0 0
  %889 = vmatpush.bf16.msra.mxu0 0
  %890 = vmatpush.bf16.msra.mxu0 0
  %891 = vmatpush.bf16.msra.mxu0 0
  %892 = vmatpush.bf16.msra.mxu0 0
  %893 = vmatpush.bf16.msra.mxu0 0
  %894 = vmatpush.bf16.msra.mxu0 %v227
  %895 = vmatpush.bf16.msra.mxu0 %v226
  %896 = vmatmul.bf16.gmra.mxu0 %v886
  %v897 = vpop.f32.mrf.mxu0
  %v898 = vadd.f32 %v878, %v897
  %v899 = vpop.f32.mrf.mxu0
  %900 = vdwg.mxu0
  %v901 = vadd.f32 %v898, %v56
  %v902 = vxor.u32 %v901, 2147483648
  %v903 = vmul.f32 %v902, 1.442695
  %v904 = vpow.pop %v903
  %v905 = vadd.f32 %v904, 1.0
  %v906 = vrcp.pop %v905
  %v907 = vmul.f32 %v905, %v906
  %v908 = vsub.f32 1.0, %v907
  %v909 = vmul.f32 %v906, %v908
  %v910 = vadd.f32 %v906, %v909
  %vm911 = vweird.f32 %v905
  %vm912 = vweird.f32 %v906
  %vm913 = vmor %vm911, %vm912
  %v914 = vsel %vm913, %v906, %v910
  %v915 = vand.u32 2147483647, %v905
  %vm916 = vcmp.eq.f32.partialorder %v915, 8.507059e+37
  %v917 = vand.u32 %v905, 2147483648
  %v918 = vor.u32 1.1754944e-38, %v917
  %v919 = vsel %vm916, %v918, %v914
  %v920 = vmul.f32 1.0, %v919
  %v921 = vmul.f32 %v920, 2.0
  %v922 = vsub.f32 %v921, 1.0
  %v923 = vmul.f32 %v920, %v802
  %925 = vrot.lane.b32.xlu0 %v922, 64
  %v926 = vpop.permute.xlu0 %925
  %v928 = vmul.f32 %v920, %v926
  %930 = vrot.lane.b32.xlu0 %v928, 32
  %v931 = vpop.permute.xlu0 %930
  %v933 = vadd.f32 %v923, %v931
  %v934 = vtanh.pop %v933
  %936 = vrot.lane.b32.xlu0 %v934, 64
  %v937 = vpop.permute.xlu0 %936
  %v939 = vmul.f32 %v920, %v937
  %940 = vmatpush.bf16.msra.mxu0 0
  %941 = vmatpush.bf16.msra.mxu0 0
  %942 = vmatpush.bf16.msra.mxu0 0
  %943 = vmatpush.bf16.msra.mxu0 0
  %944 = vmatpush.bf16.msra.mxu0 0
  %945 = vmatpush.bf16.msra.mxu0 0
  %946 = vmatpush.bf16.msra.mxu0 %v130
  %947 = vmatpush.bf16.msra.mxu0 %v129
  %948 = vmatmul.bf16.gmra.mxu0 %v886
  %v949 = vpop.f32.mrf.mxu0
  %v950 = vadd.f32 0.0, %v949
  %v951 = vpop.f32.mrf.mxu0
  %952 = vdwg.mxu0
  %v953 = vadd.f32 %v117, %v950
  %v954 = vxor.u32 %v953, 2147483648
  %v955 = vmul.f32 %v954, 1.442695
  %v956 = vpow.pop %v955
  %v957 = vadd.f32 %v956, 1.0
  %v958 = vrcp.pop %v957
  %v959 = vmul.f32 %v957, %v958
  %v960 = vsub.f32 1.0, %v959
  %v961 = vmul.f32 %v958, %v960
  %v962 = vadd.f32 %v958, %v961
  %vm963 = vweird.f32 %v957
  %vm964 = vweird.f32 %v958
  %vm965 = vmor %vm963, %vm964
  %v966 = vsel %vm965, %v958, %v962
  %v967 = vand.u32 2147483647, %v957
  %vm968 = vcmp.eq.f32.partialorder %v967, 8.507059e+37
  %v969 = vand.u32 %v957, 2147483648
  %v970 = vor.u32 1.1754944e-38, %v969
  %v971 = vsel %vm968, %v970, %v966
  %v972 = vmul.f32 1.0, %v971
  %v973 = vmul.f32 %v972, 2.0
  %v974 = vsub.f32 %v973, 1.0
  %v975 = vmul.f32 %v972, %v854
  %977 = vrot.lane.b32.xlu0 %v974, 64
  %v978 = vpop.permute.xlu0 %977
  %v980 = vmul.f32 %v972, %v978
  %982 = vrot.lane.b32.xlu0 %v980, 32
  %v983 = vpop.permute.xlu0 %982
  %v985 = vadd.f32 %v975, %v983
  %v986 = vtanh.pop %v985
  %988 = vrot.lane.b32.xlu0 %v986, 64
  %v989 = vpop.permute.xlu0 %988
  %v991 = vmul.f32 %v972, %v989
  %v992 = vpack.c.bf16 %v939, %v939
  %994 = vrot.lane.b32.xlu0 %v992, 32
  %v995 = vpop.permute.xlu0 %994
  %v997 = vsel %vm133, %v995, 0
  %999 = vmatpush.bf16.msra.mxu0 0
  %1000 = vmatpush.bf16.msra.mxu0 0
  %1001 = vmatpush.bf16.msra.mxu0 0
  %1002 = vmatpush.bf16.msra.mxu0 0
  %1003 = vmatpush.bf16.msra.mxu0 0
  %1004 = vmatpush.bf16.msra.mxu0 0
  %1005 = vmatpush.bf16.msra.mxu0 %v198
  %1006 = vmatpush.bf16.msra.mxu0 %v197
  %1007 = vmatmul.bf16.gmra.mxu0 %v997
  %v1008 = vpop.f32.mrf.mxu0
  %v1009 = vadd.f32 0.0, %v1008
  %v1010 = vpop.f32.mrf.mxu0
  %1011 = vdwg.mxu0
  %v1012 = vpack.c.bf16 %v991, %v991
  %1014 = vrot.lane.b32.xlu0 %v1012, 32
  %v1015 = vpop.permute.xlu0 %1014
  %v1017 = vsel %vm133, %v1015, 0
  %1019 = vmatpush.bf16.msra.mxu0 0
  %1020 = vmatpush.bf16.msra.mxu0 0
  %1021 = vmatpush.bf16.msra.mxu0 0
  %1022 = vmatpush.bf16.msra.mxu0 0
  %1023 = vmatpush.bf16.msra.mxu0 0
  %1024 = vmatpush.bf16.msra.mxu0 0
  %1025 = vmatpush.bf16.msra.mxu0 %v227
  %1026 = vmatpush.bf16.msra.mxu0 %v226
  %1027 = vmatmul.bf16.gmra.mxu0 %v1017
  %v1028 = vpop.f32.mrf.mxu0
  %v1029 = vadd.f32 %v1009, %v1028
  %v1030 = vpop.f32.mrf.mxu0
  %1031 = vdwg.mxu0
  %v1032 = vadd.f32 %v1029, %v56
  %v1033 = vxor.u32 %v1032, 2147483648
  %v1034 = vmul.f32 %v1033, 1.442695
  %v1035 = vpow.pop %v1034
  %v1036 = vadd.f32 %v1035, 1.0
  %v1037 = vrcp.pop %v1036
  %v1038 = vmul.f32 %v1036, %v1037
  %v1039 = vsub.f32 1.0, %v1038
  %v1040 = vmul.f32 %v1037, %v1039
  %v1041 = vadd.f32 %v1037, %v1040
  %vm1042 = vweird.f32 %v1036
  %vm1043 = vweird.f32 %v1037
  %vm1044 = vmor %vm1042, %vm1043
  %v1045 = vsel %vm1044, %v1037, %v1041
  %v1046 = vand.u32 2147483647, %v1036
  %vm1047 = vcmp.eq.f32.partialorder %v1046, 8.507059e+37
  %v1048 = vand.u32 %v1036, 2147483648
  %v1049 = vor.u32 1.1754944e-38, %v1048
  %v1050 = vsel %vm1047, %v1049, %v1045
  %v1051 = vmul.f32 1.0, %v1050
  %v1052 = vmul.f32 %v1051, 2.0
  %v1053 = vsub.f32 %v1052, 1.0
  %v1054 = vmul.f32 %v1051, %v933
  %1056 = vrot.lane.b32.xlu0 %v1053, 64
  %v1057 = vpop.permute.xlu0 %1056
  %v1059 = vmul.f32 %v1051, %v1057
  %1061 = vrot.lane.b32.xlu0 %v1059, 32
  %v1062 = vpop.permute.xlu0 %1061
  %v1064 = vadd.f32 %v1054, %v1062
  %v1065 = vtanh.pop %v1064
  %1067 = vrot.lane.b32.xlu0 %v1065, 64
  %v1068 = vpop.permute.xlu0 %1067
  %v1070 = vmul.f32 %v1051, %v1068
  %1071 = vmatpush.bf16.msra.mxu0 0
  %1072 = vmatpush.bf16.msra.mxu0 0
  %1073 = vmatpush.bf16.msra.mxu0 0
  %1074 = vmatpush.bf16.msra.mxu0 0
  %1075 = vmatpush.bf16.msra.mxu0 0
  %1076 = vmatpush.bf16.msra.mxu0 0
  %1077 = vmatpush.bf16.msra.mxu0 %v130
  %1078 = vmatpush.bf16.msra.mxu0 %v129
  %1079 = vmatmul.bf16.gmra.mxu0 %v1017
  %v1080 = vpop.f32.mrf.mxu0
  %v1081 = vadd.f32 0.0, %v1080
  %v1082 = vpop.f32.mrf.mxu0
  %1083 = vdwg.mxu0
  %v1084 = vadd.f32 %v119, %v1081
  %v1085 = vxor.u32 %v1084, 2147483648
  %v1086 = vmul.f32 %v1085, 1.442695
  %v1087 = vpow.pop %v1086
  %v1088 = vadd.f32 %v1087, 1.0
  %v1089 = vrcp.pop %v1088
  %v1090 = vmul.f32 %v1088, %v1089
  %v1091 = vsub.f32 1.0, %v1090
  %v1092 = vmul.f32 %v1089, %v1091
  %v1093 = vadd.f32 %v1089, %v1092
  %vm1094 = vweird.f32 %v1088
  %vm1095 = vweird.f32 %v1089
  %vm1096 = vmor %vm1094, %vm1095
  %v1097 = vsel %vm1096, %v1089, %v1093
  %v1098 = vand.u32 2147483647, %v1088
  %vm1099 = vcmp.eq.f32.partialorder %v1098, 8.507059e+37
  %v1100 = vand.u32 %v1088, 2147483648
  %v1101 = vor.u32 1.1754944e-38, %v1100
  %v1102 = vsel %vm1099, %v1101, %v1097
  %v1103 = vmul.f32 1.0, %v1102
  %v1104 = vmul.f32 %v1103, 2.0
  %v1105 = vsub.f32 %v1104, 1.0
  %v1106 = vmul.f32 %v1103, %v985
  %1108 = vrot.lane.b32.xlu0 %v1105, 64
  %v1109 = vpop.permute.xlu0 %1108
  %v1111 = vmul.f32 %v1103, %v1109
  %1113 = vrot.lane.b32.xlu0 %v1111, 32
  %v1114 = vpop.permute.xlu0 %1113
  %v1116 = vadd.f32 %v1106, %v1114
  %v1117 = vtanh.pop %v1116
  %1119 = vrot.lane.b32.xlu0 %v1117, 64
  %v1120 = vpop.permute.xlu0 %1119
  %v1122 = vmul.f32 %v1103, %v1120
  %v1123 = vpack.c.bf16 %v1070, %v1070
  %1125 = vrot.lane.b32.xlu0 %v1123, 32
  %v1126 = vpop.permute.xlu0 %1125
  %v1128 = vsel %vm133, %v1126, 0
  %1130 = vmatpush.bf16.msra.mxu0 0
  %1131 = vmatpush.bf16.msra.mxu0 0
  %1132 = vmatpush.bf16.msra.mxu0 0
  %1133 = vmatpush.bf16.msra.mxu0 0
  %1134 = vmatpush.bf16.msra.mxu0 0
  %1135 = vmatpush.bf16.msra.mxu0 0
  %1136 = vmatpush.bf16.msra.mxu0 %v198
  %1137 = vmatpush.bf16.msra.mxu0 %v197
  %1138 = vmatmul.bf16.gmra.mxu0 %v1128
  %v1139 = vpop.f32.mrf.mxu0
  %v1140 = vadd.f32 0.0, %v1139
  %v1141 = vpop.f32.mrf.mxu0
  %1142 = vdwg.mxu0
  %v1143 = vpack.c.bf16 %v1122, %v1122
  %1145 = vrot.lane.b32.xlu0 %v1143, 32
  %v1146 = vpop.permute.xlu0 %1145
  %v1148 = vsel %vm133, %v1146, 0
  %1150 = vmatpush.bf16.msra.mxu0 0
  %1151 = vmatpush.bf16.msra.mxu0 0
  %1152 = vmatpush.bf16.msra.mxu0 0
  %1153 = vmatpush.bf16.msra.mxu0 0
  %1154 = vmatpush.bf16.msra.mxu0 0
  %1155 = vmatpush.bf16.msra.mxu0 0
  %1156 = vmatpush.bf16.msra.mxu0 %v227
  %1157 = vmatpush.bf16.msra.mxu0 %v226
  %1158 = vmatmul.bf16.gmra.mxu0 %v1148
  %v1159 = vpop.f32.mrf.mxu0
  %v1160 = vadd.f32 %v1140, %v1159
  %v1161 = vpop.f32.mrf.mxu0
  %1162 = vdwg.mxu0
  %v1163 = vadd.f32 %v1160, %v56
  %v1164 = vxor.u32 %v1163, 2147483648
  %v1165 = vmul.f32 %v1164, 1.442695
  %v1166 = vpow.pop %v1165
  %v1167 = vadd.f32 %v1166, 1.0
  %v1168 = vrcp.pop %v1167
  %v1169 = vmul.f32 %v1167, %v1168
  %v1170 = vsub.f32 1.0, %v1169
  %v1171 = vmul.f32 %v1168, %v1170
  %v1172 = vadd.f32 %v1168, %v1171
  %vm1173 = vweird.f32 %v1167
  %vm1174 = vweird.f32 %v1168
  %vm1175 = vmor %vm1173, %vm1174
  %v1176 = vsel %vm1175, %v1168, %v1172
  %v1177 = vand.u32 2147483647, %v1167
  %vm1178 = vcmp.eq.f32.partialorder %v1177, 8.507059e+37
  %v1179 = vand.u32 %v1167, 2147483648
  %v1180 = vor.u32 1.1754944e-38, %v1179
  %v1181 = vsel %vm1178, %v1180, %v1176
  %v1182 = vmul.f32 1.0, %v1181
  %v1183 = vmul.f32 %v1182, 2.0
  %v1184 = vsub.f32 %v1183, 1.0
  %v1185 = vmul.f32 %v1182, %v1064
  %1187 = vrot.lane.b32.xlu0 %v1184, 64
  %v1188 = vpop.permute.xlu0 %1187
  %v1190 = vmul.f32 %v1182, %v1188
  %1192 = vrot.lane.b32.xlu0 %v1190, 32
  %v1193 = vpop.permute.xlu0 %1192
  %v1195 = vadd.f32 %v1185, %v1193
  %v1196 = vtanh.pop %v1195
  %1198 = vrot.lane.b32.xlu0 %v1196, 64
  %v1199 = vpop.permute.xlu0 %1198
  %v1201 = vmul.f32 %v1182, %v1199
  %v1202 = vpack.c.bf16 %v1201, %v1201
  %v1203 = vld [vmem:[%s7] sm:$0xf]
  %v1204 = vld [vmem:[%s7 + $0x4] sm:$0xf]
  %v1205 = vld [vmem:[%s7 + $0x8] sm:$0xf]
  %v1206 = vld [vmem:[%s7 + $0xc] sm:$0xf]
  %v1207 = vld [vmem:[%s8] sm:$0x1]
  %v1209 = vperm.slane %v1207, 0
  %1212 = vrot.lane.b32.xlu0 %v1202, 32
  %v1213 = vpop.permute.xlu0 %1212
  %v1218 = vunpack.c.l.b16 %v1203
  %v1219 = vunpack.c.l.b16 %v1204
  %v1220 = vunpack.c.l.b16 %v1205
  %v1221 = vunpack.c.l.b16 %v1206
  %v1222 = vpack.c.b16 %v1219, %v1218
  %v1223 = vpack.c.b16 %v1221, %v1220
  %v1227 = vsel %vm133, %v1213, 0
  %1229 = vmatpush.bf16.msra.mxu0 0
  %1230 = vmatpush.bf16.msra.mxu0 0
  %1231 = vmatpush.bf16.msra.mxu0 0
  %1232 = vmatpush.bf16.msra.mxu0 0
  %1233 = vmatpush.bf16.msra.mxu0 0
  %1234 = vmatpush.bf16.msra.mxu0 0
  %1235 = vmatpush.bf16.msra.mxu0 %v1223
  %1236 = vmatpush.bf16.msra.mxu0 %v1222
  %1237 = vmatmul.bf16.gmra.mxu0 %v1227
  %v1238 = vpop.f32.mrf.mxu0
  %v1239 = vadd.f32 %v1209, %v1238
  %v1240 = vpop.f32.mrf.mxu0
  %1241 = vdwg.mxu0
  %v1242 = vmax.f32 %v1239, 0.0
  %v1243 = vpack.c.bf16 %v1242, %v1242
  %v1244 = vld [vmem:[%s9] sm:$0xf]
  %v1245 = vld [vmem:[%s9 + $0x4] sm:$0xf]
  %v1246 = vld [vmem:[%s9 + $0x8] sm:$0xf]
  %v1247 = vld [vmem:[%s9 + $0xc] sm:$0xf]
  %v1248 = vld [vmem:[%s9 + $0x10] sm:$0xf]
  %v1249 = vld [vmem:[%s9 + $0x14] sm:$0xf]
  %v1250 = vld [vmem:[%s9 + $0x18] sm:$0xf]
  %v1251 = vld [vmem:[%s9 + $0x1c] sm:$0xf]
  %v1252 = vld [vmem:[%s10] sm:$0x1]
  %v1254 = vperm.slane %v1252, 0
  %v1264 = vunpack.c.l.b16 %v1244
  %v1265 = vunpack.c.l.b16 %v1245
  %v1266 = vunpack.c.l.b16 %v1246
  %v1267 = vunpack.c.l.b16 %v1247
  %v1268 = vunpack.c.l.b16 %v1248
  %v1269 = vunpack.c.l.b16 %v1249
  %v1270 = vunpack.c.l.b16 %v1250
  %v1271 = vunpack.c.l.b16 %v1251
  %v1272 = vpack.c.b16 %v1265, %v1264
  %v1273 = vpack.c.b16 %v1267, %v1266
  %v1274 = vpack.c.b16 %v1269, %v1268
  %v1275 = vpack.c.b16 %v1271, %v1270
  %vm1280 = vcmask 523264
  %v1282 = vsel %vm1280, %v1243, 0
  %1284 = vmatpush.bf16.msra.mxu0 0
  %1285 = vmatpush.bf16.msra.mxu0 0
  %1286 = vmatpush.bf16.msra.mxu0 0
  %1287 = vmatpush.bf16.msra.mxu0 0
  %1288 = vmatpush.bf16.msra.mxu0 %v1275
  %1289 = vmatpush.bf16.msra.mxu0 %v1274
  %1290 = vmatpush.bf16.msra.mxu0 %v1273
  %1291 = vmatpush.bf16.msra.mxu0 %v1272
  %1292 = vmatmul.bf16.gmra.mxu0 %v1282
  %v1293 = vpop.f32.mrf.mxu0
  %v1294 = vadd.f32 %v1254, %v1293
  %v1295 = vpop.f32.mrf.mxu0
  %1296 = vdwg.mxu0
  %1297 = vst [vmem:[%s11] sm:$0xff] %v1294
  // Predicated region
  $region46: #{lstm_net_forward.1} parent=0 // pred_check
    _
  $region47: #{lstm_net_forward.1} parent=0 // pred_check_branch
    %1299 = sbr.rel (0) target = $region49
  $region48: #{lstm_net_forward.1} parent=0 // pred_region
    _
  $region49: #{lstm_net_forward.1} parent=0 // pred_fallthru
    _
  // Predicated region
  $region50: #{lstm_net_forward.1} parent=0 // pred_check
    _
  $region51: #{lstm_net_forward.1} parent=0 // pred_check_branch
    %1301 = sbr.rel (0) target = $region53
  $region52: #{lstm_net_forward.1} parent=0 // pred_region
    _
  $region53: #{lstm_net_forward.1} parent=0 // pred_fallthru
    _

</llo_original>
